<compile_context>
chip_gen: v7x
topology: tpu7x:2x2x1
jax: 0.10.0
libtpu: 0.0.40
codegen_flags: <defaults>
</compile_context>

<pallas_src>
import functools

import jax
import jax.numpy as jnp
import numpy as np
from jax.experimental import pallas as pl
from jax.experimental.pallas import tpu as pltpu


def _gru_classifier_kernel(x_ref, wih0_ref, bin0_ref, whh0_ref, bhn0_ref,
                           wcat_ref, bcat_ref, wout_ref, bout_ref,
                           out_ref, gi0_ref, htop_ref, *, num_layers):
    """Single-invocation GRU stack + classifier head.

    x_ref   : (T*Bp, Fp)            time-major, batch-padded, feature-padded input
    wih0_ref: (Fp, 3H)              layer-0 W_ih^T (zero-padded feature rows)
    bin0_ref: (1, 3H)               layer-0 combined input-side bias (b_ih + r/z parts of b_hh)
    whh0_ref: (H, 3H)               layer-0 W_hh^T
    bhn0_ref: (1, H)                layer-0 n-gate hidden bias (multiplied by r)
    wcat_ref: (max(L-1,1), 2H, 4H)  fused [W_ih^T; W_hh^T] for layers 1..L-1, gate groups
                                    [r, z, n_input, n_hidden]
    bcat_ref: (max(L-1,1), 1, 4H)   fused bias [b_ir+b_hr, b_iz+b_hz, b_in, b_hn]
    wout_ref: (1, H)                linear head weight row
    bout_ref: (1, 1)                linear head bias
    out_ref : (T, Bp)               sigmoid probabilities (time-major)
    gi0_ref : (T*Bp, 3H)            scratch: layer-0 input projections for all steps
    htop_ref: (T, Bp, H)            scratch: top-layer hidden states
    """
    T, Bp, H = htop_ref.shape
    L = num_layers

    # Off the serial path: layer-0 input projection for ALL time steps as one batched MXU dot.
    gi0_ref[...] = (jnp.dot(x_ref[...], wih0_ref[...],
                            preferred_element_type=jnp.float32) + bin0_ref[...])

    # Hoist resident weight / bias loads (and their broadcasts) out of the time loop.
    whh0 = whh0_ref[...]
    bhn0 = bhn0_ref[...]
    wcat = [wcat_ref[l] for l in range(L - 1)]
    bcat = [bcat_ref[l] for l in range(L - 1)]

    def step(t, hs):
        hs = list(hs)

        # ---- layer 0: precomputed input projection; only h @ W_hh0 is on the serial path ----
        row = pl.multiple_of(t * Bp, Bp)
        gi = gi0_ref[pl.ds(row, Bp), :]                                 # (Bp, 3H)
        gh = jnp.dot(hs[0], whh0, preferred_element_type=jnp.float32)   # (Bp, 3H)
        # TODO(synk): gate slices sit at 32-lane offsets; if bundle dumps show relayout filler,
        # pad each gate group to a 128-lane boundary in the packed weights.
        r = jax.nn.sigmoid(gi[:, :H] + gh[:, :H])
        z = jax.nn.sigmoid(gi[:, H:2 * H] + gh[:, H:2 * H])
        n = jnp.tanh(gi[:, 2 * H:] + r * (gh[:, 2 * H:] + bhn0))
        h_new = (1.0 - z) * n + z * hs[0]
        hs[0] = h_new
        inp = h_new

        # ---- layers 1..L-1: single fused dot per layer per step (halves serial MXU ops) ----
        for l in range(1, L):                                           # static unroll over layers
            h_prev = hs[l]
            cat = jnp.concatenate([inp, h_prev], axis=-1)               # (Bp, 2H) cheap lane concat
            g = (jnp.dot(cat, wcat[l - 1], preferred_element_type=jnp.float32)
                 + bcat[l - 1])                                         # (Bp, 4H)
            r = jax.nn.sigmoid(g[:, :H])
            z = jax.nn.sigmoid(g[:, H:2 * H])
            n = jnp.tanh(g[:, 2 * H:3 * H] + r * g[:, 3 * H:])
            h_new = (1.0 - z) * n + z * h_prev
            hs[l] = h_new
            inp = h_new
            # TODO(synk): nn.GRU inter-layer dropout is training-only; inference forward is identity.

        htop_ref[t] = inp                                               # stash top-layer hidden state
        return tuple(hs)

    h0 = tuple(jnp.zeros((Bp, H), jnp.float32) for _ in range(L))
    # Partial unroll keeps LLO scheduling visibility without a register-pressure cliff at large T.
    jax.lax.fori_loop(0, T, step, h0, unroll=min(T, 8))

    # Batched classifier head over all T at once: VPU multiply + lane reduction, one output store.
    logits = jnp.sum(htop_ref[...] * wout_ref[...], axis=-1) + bout_ref[...]   # (T, Bp)
    out_ref[...] = jax.nn.sigmoid(logits)


def gru_classifier_forward(x, params):
    """x: (B, T, input_size) float32 -> prob of shape torch-squeeze((B, T, 1))."""
    wih_list, whh_list, bih_list, bhh_list, w_lin, b_lin = params
    B, T, f_in = x.shape
    H = whh_list[0].shape[1]
    L = len(wih_list)
    Bp = ((B + 7) // 8) * 8                          # pad batch to a sublane multiple
    Fp = ((f_in + 7) // 8) * 8                       # pad features to a sublane multiple

    # ---- parameter packing (plain-JAX glue) ----
    zeros_h = jnp.zeros((H,), jnp.float32)
    # Layer 0: fold r/z parts of b_hh into the input-side bias; n-gate hidden bias stays separate
    # (it is multiplied by r inside the cell).
    bin0 = (bih_list[0] + jnp.concatenate([bhh_list[0][:2 * H], zeros_h])).reshape(1, 3 * H)
    wih0_t = jnp.zeros((Fp, 3 * H), jnp.float32).at[:f_in].set(wih_list[0].T)
    whh0_t = whh_list[0].T                                               # (H, 3H)
    bhn0 = bhh_list[0][2 * H:].reshape(1, H)

    # Layers 1..L-1: fuse W_ih / W_hh into one (2H, 4H) weight with gate groups
    # [r, z, n_input, n_hidden]; fold all biases into one (1, 4H) vector.
    if L > 1:
        zeros_hh = jnp.zeros((H, H), jnp.float32)
        w_rows, b_rows = [], []
        for l in range(1, L):
            wi = wih_list[l].T                                           # (H, 3H)
            wh = whh_list[l].T                                           # (H, 3H)
            top = jnp.concatenate([wi[:, :2 * H], wi[:, 2 * H:], zeros_hh], axis=1)  # (H, 4H)
            bot = jnp.concatenate([wh[:, :2 * H], zeros_hh, wh[:, 2 * H:]], axis=1)  # (H, 4H)
            w_rows.append(jnp.concatenate([top, bot], axis=0))            # (2H, 4H)
            b_rows.append(jnp.concatenate([bih_list[l][:2 * H] + bhh_list[l][:2 * H],
                                           bih_list[l][2 * H:], bhh_list[l][2 * H:]]))
        wcat = jnp.stack(w_rows)                                          # (L-1, 2H, 4H)
        bcat = jnp.stack(b_rows).reshape(L - 1, 1, 4 * H)                 # (L-1, 1, 4H)
    else:
        wcat = jnp.zeros((1, 2 * H, 4 * H), jnp.float32)                  # dummy, never read
        bcat = jnp.zeros((1, 1, 4 * H), jnp.float32)

    wout = w_lin.reshape(1, H)
    bout = b_lin.reshape(1, 1)

    # Batch-pad, go time-major and flatten (T, Bp) so the in-kernel layer-0 projection is one dot.
    x_p = jnp.pad(x, ((0, Bp - B), (0, 0), (0, Fp - f_in)))              # (Bp, T, Fp)
    x_tb = jnp.transpose(x_p, (1, 0, 2)).reshape(T * Bp, Fp)             # (T*Bp, Fp)

    # Explicit scoped-VMEM budget (default scoped limit is only 16/32 MiB); scales with T,
    # capped under the smallest physical VMEM (v7x: 64 MiB per TC).
    vmem_est = 4 * (x_tb.size + wih0_t.size + whh0_t.size + wcat.size
                    + T * Bp * (4 * H + 1) + 16 * H)
    vmem_limit = int(min(60 * 2 ** 20, max(32 * 2 ** 20, 4 * vmem_est)))

    kernel = functools.partial(_gru_classifier_kernel, num_layers=L)
    out = pl.pallas_call(
        kernel,
        out_shape=jax.ShapeDtypeStruct((T, Bp), jnp.float32),
        in_specs=[pl.BlockSpec(memory_space=pltpu.MemorySpace.VMEM)] * 9,
        out_specs=pl.BlockSpec(memory_space=pltpu.MemorySpace.VMEM),
        scratch_shapes=[pltpu.VMEM((T * Bp, 3 * H), jnp.float32),   # layer-0 input projections
                        pltpu.VMEM((T, Bp, H), jnp.float32)],       # top-layer hidden states
        compiler_params=pltpu.CompilerParams(vmem_limit_bytes=vmem_limit),
    )(x_tb, wih0_t, bin0, whh0_t, bhn0, wcat, bcat, wout, bout)

    # (For very large T, emit the output lane-dense as (Bp, T) and drop this transpose.)
    prob = jnp.transpose(out)[:B]                    # (B, T), batch-first like PyTorch
    return jnp.squeeze(prob)                         # mirrors torch Tensor.squeeze()


def gru_classifier_ref(x, params):
    """Pure-JAX reference matching torch.nn.GRU + Linear + Sigmoid + squeeze (eval mode)."""
    wih_list, whh_list, bih_list, bhh_list, w_lin, b_lin = params
    B, T, _ = x.shape
    L = len(wih_list)
    H = whh_list[0].shape[1]
    h = [jnp.zeros((B, H), jnp.float32) for _ in range(L)]
    outs = []
    for t in range(T):
        inp = x[:, t, :]
        for l in range(L):
            gi = inp @ wih_list[l].T + bih_list[l]
            gh = h[l] @ whh_list[l].T + bhh_list[l]
            i_r, i_z, i_n = jnp.split(gi, 3, axis=-1)
            h_r, h_z, h_n = jnp.split(gh, 3, axis=-1)
            r = jax.nn.sigmoid(i_r + h_r)
            z = jax.nn.sigmoid(i_z + h_z)
            n = jnp.tanh(i_n + r * h_n)
            h[l] = (1.0 - z) * n + z * h[l]
            inp = h[l]
        outs.append(inp)
    gru_out = jnp.stack(outs, axis=1)                # (B, T, H)
    logits = gru_out @ w_lin.T + b_lin               # (B, T, 1)
    return jnp.squeeze(jax.nn.sigmoid(logits))


if __name__ == "__main__":
    # Small shapes consistent with the module: batch=2, seq=8, input=8, hidden=32, layers=2.
    B, T = 2, 8
    input_size, hidden_size, num_layers = 8, 32, 2

    key = jax.random.PRNGKey(0)
    keys = jax.random.split(key, 4 * num_layers + 3)
    k_scale = 1.0 / np.sqrt(hidden_size)             # PyTorch default GRU/Linear init range

    wih_list, whh_list, bih_list, bhh_list = [], [], [], []
    ki = 0
    for l in range(num_layers):
        in_l = input_size if l == 0 else hidden_size
        wih_list.append(jax.random.uniform(keys[ki], (3 * hidden_size, in_l),
                                           jnp.float32, -k_scale, k_scale)); ki += 1
        whh_list.append(jax.random.uniform(keys[ki], (3 * hidden_size, hidden_size),
                                           jnp.float32, -k_scale, k_scale)); ki += 1
        bih_list.append(jax.random.uniform(keys[ki], (3 * hidden_size,),
                                           jnp.float32, -k_scale, k_scale)); ki += 1
        bhh_list.append(jax.random.uniform(keys[ki], (3 * hidden_size,),
                                           jnp.float32, -k_scale, k_scale)); ki += 1
    w_lin = jax.random.uniform(keys[ki], (1, hidden_size), jnp.float32, -k_scale, k_scale); ki += 1
    b_lin = jax.random.uniform(keys[ki], (1,), jnp.float32, -k_scale, k_scale); ki += 1
    x = jax.random.normal(keys[ki], (B, T, input_size), jnp.float32)

    params = (wih_list, whh_list, bih_list, bhh_list, w_lin, b_lin)

    out = gru_classifier_forward(x, params)
    out = jax.block_until_ready(out)

    ref = gru_classifier_ref(x, params)
    np.testing.assert_allclose(np.asarray(out), np.asarray(ref), rtol=1e-4, atol=1e-4)
    assert out.shape == (B, T)
    print("KERNEL_OK")
</pallas_src>

<mosaic_0001>
module attributes {stable_mosaic.version = 11 : i64} {
  func.func @_gru_classifier_kernel(%arg0: memref<64x8xf32, #tpu.memory_space<vmem>>, %arg1: memref<8x96xf32, #tpu.memory_space<vmem>>, %arg2: memref<1x96xf32, #tpu.memory_space<vmem>>, %arg3: memref<32x96xf32, #tpu.memory_space<vmem>>, %arg4: memref<1x32xf32, #tpu.memory_space<vmem>>, %arg5: memref<1x64x128xf32, #tpu.memory_space<vmem>>, %arg6: memref<1x1x128xf32, #tpu.memory_space<vmem>>, %arg7: memref<1x32xf32, #tpu.memory_space<vmem>>, %arg8: memref<1x1xf32, #tpu.memory_space<vmem>>, %arg9: memref<8x8xf32, #tpu.memory_space<vmem>>, %arg10: memref<64x96xf32, #tpu.memory_space<vmem>>, %arg11: memref<8x8x32xf32, #tpu.memory_space<vmem>>) attributes {dimension_semantics = [], scalar_prefetch = 0 : i64, scratch_operands = 2 : i64, tpu.core_type = #tpu.core_type<tc>} {
    %c0 = arith.constant 0 : index
    %c0_0 = arith.constant 0 : index
    %0 = vector.load %arg0[%c0, %c0_0] : memref<64x8xf32, #tpu.memory_space<vmem>>, vector<64x8xf32>
    %c0_1 = arith.constant 0 : index
    %c0_2 = arith.constant 0 : index
    %1 = vector.load %arg1[%c0_1, %c0_2] : memref<8x96xf32, #tpu.memory_space<vmem>>, vector<8x96xf32>
    %cst = arith.constant dense<0.000000e+00> : vector<64x96xf32>
    %2 = tpu.matmul %0, %1, %cst {dimension_numbers = #tpu.dot_dimension_numbers<[1], [0], [0], [1], [0, 0, 1, 1], [], []>} : vector<64x8xf32>, vector<8x96xf32>, vector<64x96xf32> -> vector<64x96xf32>
    %c0_3 = arith.constant 0 : index
    %c0_4 = arith.constant 0 : index
    %3 = vector.load %arg2[%c0_3, %c0_4] : memref<1x96xf32, #tpu.memory_space<vmem>>, vector<1x96xf32>
    %4 = vector.broadcast %3 : vector<1x96xf32> to vector<64x96xf32>
    %5 = arith.addf %2, %4 : vector<64x96xf32>
    %c0_5 = arith.constant 0 : index
    %c0_6 = arith.constant 0 : index
    %6 = vector.load %arg10[%c0_5, %c0_6] : memref<64x96xf32, #tpu.memory_space<vmem>>, vector<64x96xf32>
    tpu.vector_store %arg10[%c0_5, %c0_6], %5 {strides = array<i32>} : memref<64x96xf32, #tpu.memory_space<vmem>>, vector<64x96xf32>,
    %c0_7 = arith.constant 0 : index
    %c0_8 = arith.constant 0 : index
    %7 = vector.load %arg3[%c0_7, %c0_8] : memref<32x96xf32, #tpu.memory_space<vmem>>, vector<32x96xf32>
    %c0_9 = arith.constant 0 : index
    %c0_10 = arith.constant 0 : index
    %8 = vector.load %arg4[%c0_9, %c0_10] : memref<1x32xf32, #tpu.memory_space<vmem>>, vector<1x32xf32>
    %c0_11 = arith.constant 0 : index
    %c0_12 = arith.constant 0 : index
    %c0_13 = arith.constant 0 : index
    %9 = vector.load %arg5[%c0_11, %c0_12, %c0_13] : memref<1x64x128xf32, #tpu.memory_space<vmem>>, vector<1x64x128xf32>
    %10 = vector.shape_cast %9 : vector<1x64x128xf32> to vector<64x128xf32>
    %c0_14 = arith.constant 0 : index
    %c0_15 = arith.constant 0 : index
    %c0_16 = arith.constant 0 : index
    %11 = vector.load %arg6[%c0_14, %c0_15, %c0_16] : memref<1x1x128xf32, #tpu.memory_space<vmem>>, vector<1x1x128xf32>
    %12 = vector.shape_cast %11 : vector<1x1x128xf32> to vector<1x128xf32>
    %cst_17 = arith.constant 0.000000e+00 : f32
    %13 = vector.broadcast %cst_17 : f32 to vector<8x32xf32>
    %cst_18 = arith.constant 0.000000e+00 : f32
    %14 = vector.broadcast %cst_18 : f32 to vector<8x32xf32>
    %c0_i32 = arith.constant 0 : i32
    %c8_i32 = arith.constant 8 : i32
    %15 = arith.muli %c0_i32, %c8_i32 : i32
    %16 = tpu.assume_multiple %15, 8 : i32
    %17 = arith.index_cast %16 : i32 to index
    %c0_19 = arith.constant 0 : index
    %18 = vector.load %arg10[%17, %c0_19] : memref<64x96xf32, #tpu.memory_space<vmem>>, vector<8x96xf32>
    %cst_20 = arith.constant dense<0.000000e+00> : vector<8x96xf32>
    %19 = tpu.matmul %13, %7, %cst_20 {dimension_numbers = #tpu.dot_dimension_numbers<[1], [0], [0], [1], [0, 0, 1, 1], [], []>} : vector<8x32xf32>, vector<32x96xf32>, vector<8x96xf32> -> vector<8x96xf32>
    %20 = vector.extract_strided_slice %18 {offsets = [0, 0], sizes = [8, 32], strides = [1, 1]} : vector<8x96xf32> to vector<8x32xf32>
    %21 = vector.extract_strided_slice %19 {offsets = [0, 0], sizes = [8, 32], strides = [1, 1]} : vector<8x96xf32> to vector<8x32xf32>
    %22 = arith.addf %20, %21 : vector<8x32xf32>
    %23 = arith.negf %22 : vector<8x32xf32>
    %24 = math.exp %23 : vector<8x32xf32>
    %cst_21 = arith.constant 1.000000e+00 : f32
    %25 = vector.broadcast %cst_21 : f32 to vector<8x32xf32>
    %26 = arith.addf %25, %24 : vector<8x32xf32>
    %27 = arith.divf %25, %26 : vector<8x32xf32>
    %28 = vector.extract_strided_slice %18 {offsets = [0, 32], sizes = [8, 32], strides = [1, 1]} : vector<8x96xf32> to vector<8x32xf32>
    %29 = vector.extract_strided_slice %19 {offsets = [0, 32], sizes = [8, 32], strides = [1, 1]} : vector<8x96xf32> to vector<8x32xf32>
    %30 = arith.addf %28, %29 : vector<8x32xf32>
    %31 = arith.negf %30 : vector<8x32xf32>
    %32 = math.exp %31 : vector<8x32xf32>
    %cst_22 = arith.constant 1.000000e+00 : f32
    %33 = vector.broadcast %cst_22 : f32 to vector<8x32xf32>
    %34 = arith.addf %33, %32 : vector<8x32xf32>
    %35 = arith.divf %33, %34 : vector<8x32xf32>
    %36 = vector.extract_strided_slice %18 {offsets = [0, 64], sizes = [8, 32], strides = [1, 1]} : vector<8x96xf32> to vector<8x32xf32>
    %37 = vector.extract_strided_slice %19 {offsets = [0, 64], sizes = [8, 32], strides = [1, 1]} : vector<8x96xf32> to vector<8x32xf32>
    %38 = vector.broadcast %8 : vector<1x32xf32> to vector<8x32xf32>
    %39 = arith.addf %37, %38 : vector<8x32xf32>
    %40 = arith.mulf %27, %39 : vector<8x32xf32>
    %41 = arith.addf %36, %40 : vector<8x32xf32>
    %42 = math.tanh %41 : vector<8x32xf32>
    %cst_23 = arith.constant 1.000000e+00 : f32
    %43 = vector.broadcast %cst_23 : f32 to vector<8x32xf32>
    %44 = arith.subf %43, %35 : vector<8x32xf32>
    %45 = arith.mulf %44, %42 : vector<8x32xf32>
    %46 = arith.mulf %35, %13 : vector<8x32xf32>
    %47 = arith.addf %45, %46 : vector<8x32xf32>
    %48 = tpu.concatenate %47, %14 in 1 : vector<8x32xf32>, vector<8x32xf32> -> vector<8x64xf32>
    %cst_24 = arith.constant dense<0.000000e+00> : vector<8x128xf32>
    %49 = tpu.matmul %48, %10, %cst_24 {dimension_numbers = #tpu.dot_dimension_numbers<[1], [0], [0], [1], [0, 0, 1, 1], [], []>} : vector<8x64xf32>, vector<64x128xf32>, vector<8x128xf32> -> vector<8x128xf32>
    %50 = vector.broadcast %12 : vector<1x128xf32> to vector<8x128xf32>
    %51 = arith.addf %49, %50 : vector<8x128xf32>
    %52 = vector.extract_strided_slice %51 {offsets = [0, 0], sizes = [8, 32], strides = [1, 1]} : vector<8x128xf32> to vector<8x32xf32>
    %53 = arith.negf %52 : vector<8x32xf32>
    %54 = math.exp %53 : vector<8x32xf32>
    %cst_25 = arith.constant 1.000000e+00 : f32
    %55 = vector.broadcast %cst_25 : f32 to vector<8x32xf32>
    %56 = arith.addf %55, %54 : vector<8x32xf32>
    %57 = arith.divf %55, %56 : vector<8x32xf32>
    %58 = vector.extract_strided_slice %51 {offsets = [0, 32], sizes = [8, 32], strides = [1, 1]} : vector<8x128xf32> to vector<8x32xf32>
    %59 = arith.negf %58 : vector<8x32xf32>
    %60 = math.exp %59 : vector<8x32xf32>
    %cst_26 = arith.constant 1.000000e+00 : f32
    %61 = vector.broadcast %cst_26 : f32 to vector<8x32xf32>
    %62 = arith.addf %61, %60 : vector<8x32xf32>
    %63 = arith.divf %61, %62 : vector<8x32xf32>
    %64 = vector.extract_strided_slice %51 {offsets = [0, 64], sizes = [8, 32], strides = [1, 1]} : vector<8x128xf32> to vector<8x32xf32>
    %65 = vector.extract_strided_slice %51 {offsets = [0, 96], sizes = [8, 32], strides = [1, 1]} : vector<8x128xf32> to vector<8x32xf32>
    %66 = arith.mulf %57, %65 : vector<8x32xf32>
    %67 = arith.addf %64, %66 : vector<8x32xf32>
    %68 = math.tanh %67 : vector<8x32xf32>
    %cst_27 = arith.constant 1.000000e+00 : f32
    %69 = vector.broadcast %cst_27 : f32 to vector<8x32xf32>
    %70 = arith.subf %69, %63 : vector<8x32xf32>
    %71 = arith.mulf %70, %68 : vector<8x32xf32>
    %72 = arith.mulf %63, %14 : vector<8x32xf32>
    %73 = arith.addf %71, %72 : vector<8x32xf32>
    %74 = arith.index_cast %c0_i32 : i32 to index
    %c0_28 = arith.constant 0 : index
    %c0_29 = arith.constant 0 : index
    %75 = vector.load %arg11[%74, %c0_28, %c0_29] : memref<8x8x32xf32, #tpu.memory_space<vmem>>, vector<1x8x32xf32>
    %76 = vector.shape_cast %75 : vector<1x8x32xf32> to vector<8x32xf32>
    %77 = vector.shape_cast %73 : vector<8x32xf32> to vector<1x8x32xf32>
    tpu.vector_store %arg11[%74, %c0_28, %c0_29], %77 {strides = array<i32>} : memref<8x8x32xf32, #tpu.memory_space<vmem>>, vector<1x8x32xf32>,
    %c1_i32 = arith.constant 1 : i32
    %c8_i32_30 = arith.constant 8 : i32
    %78 = arith.muli %c1_i32, %c8_i32_30 : i32
    %79 = tpu.assume_multiple %78, 8 : i32
    %80 = arith.index_cast %79 : i32 to index
    %c0_31 = arith.constant 0 : index
    %81 = vector.load %arg10[%80, %c0_31] : memref<64x96xf32, #tpu.memory_space<vmem>>, vector<8x96xf32>
    %cst_32 = arith.constant dense<0.000000e+00> : vector<8x96xf32>
    %82 = tpu.matmul %47, %7, %cst_32 {dimension_numbers = #tpu.dot_dimension_numbers<[1], [0], [0], [1], [0, 0, 1, 1], [], []>} : vector<8x32xf32>, vector<32x96xf32>, vector<8x96xf32> -> vector<8x96xf32>
    %83 = vector.extract_strided_slice %81 {offsets = [0, 0], sizes = [8, 32], strides = [1, 1]} : vector<8x96xf32> to vector<8x32xf32>
    %84 = vector.extract_strided_slice %82 {offsets = [0, 0], sizes = [8, 32], strides = [1, 1]} : vector<8x96xf32> to vector<8x32xf32>
    %85 = arith.addf %83, %84 : vector<8x32xf32>
    %86 = arith.negf %85 : vector<8x32xf32>
    %87 = math.exp %86 : vector<8x32xf32>
    %cst_33 = arith.constant 1.000000e+00 : f32
    %88 = vector.broadcast %cst_33 : f32 to vector<8x32xf32>
    %89 = arith.addf %88, %87 : vector<8x32xf32>
    %90 = arith.divf %88, %89 : vector<8x32xf32>
    %91 = vector.extract_strided_slice %81 {offsets = [0, 32], sizes = [8, 32], strides = [1, 1]} : vector<8x96xf32> to vector<8x32xf32>
    %92 = vector.extract_strided_slice %82 {offsets = [0, 32], sizes = [8, 32], strides = [1, 1]} : vector<8x96xf32> to vector<8x32xf32>
    %93 = arith.addf %91, %92 : vector<8x32xf32>
    %94 = arith.negf %93 : vector<8x32xf32>
    %95 = math.exp %94 : vector<8x32xf32>
    %cst_34 = arith.constant 1.000000e+00 : f32
    %96 = vector.broadcast %cst_34 : f32 to vector<8x32xf32>
    %97 = arith.addf %96, %95 : vector<8x32xf32>
    %98 = arith.divf %96, %97 : vector<8x32xf32>
    %99 = vector.extract_strided_slice %81 {offsets = [0, 64], sizes = [8, 32], strides = [1, 1]} : vector<8x96xf32> to vector<8x32xf32>
    %100 = vector.extract_strided_slice %82 {offsets = [0, 64], sizes = [8, 32], strides = [1, 1]} : vector<8x96xf32> to vector<8x32xf32>
    %101 = vector.broadcast %8 : vector<1x32xf32> to vector<8x32xf32>
    %102 = arith.addf %100, %101 : vector<8x32xf32>
    %103 = arith.mulf %90, %102 : vector<8x32xf32>
    %104 = arith.addf %99, %103 : vector<8x32xf32>
    %105 = math.tanh %104 : vector<8x32xf32>
    %cst_35 = arith.constant 1.000000e+00 : f32
    %106 = vector.broadcast %cst_35 : f32 to vector<8x32xf32>
    %107 = arith.subf %106, %98 : vector<8x32xf32>
    %108 = arith.mulf %107, %105 : vector<8x32xf32>
    %109 = arith.mulf %98, %47 : vector<8x32xf32>
    %110 = arith.addf %108, %109 : vector<8x32xf32>
    %111 = tpu.concatenate %110, %73 in 1 : vector<8x32xf32>, vector<8x32xf32> -> vector<8x64xf32>
    %cst_36 = arith.constant dense<0.000000e+00> : vector<8x128xf32>
    %112 = tpu.matmul %111, %10, %cst_36 {dimension_numbers = #tpu.dot_dimension_numbers<[1], [0], [0], [1], [0, 0, 1, 1], [], []>} : vector<8x64xf32>, vector<64x128xf32>, vector<8x128xf32> -> vector<8x128xf32>
    %113 = vector.broadcast %12 : vector<1x128xf32> to vector<8x128xf32>
    %114 = arith.addf %112, %113 : vector<8x128xf32>
    %115 = vector.extract_strided_slice %114 {offsets = [0, 0], sizes = [8, 32], strides = [1, 1]} : vector<8x128xf32> to vector<8x32xf32>
    %116 = arith.negf %115 : vector<8x32xf32>
    %117 = math.exp %116 : vector<8x32xf32>
    %cst_37 = arith.constant 1.000000e+00 : f32
    %118 = vector.broadcast %cst_37 : f32 to vector<8x32xf32>
    %119 = arith.addf %118, %117 : vector<8x32xf32>
    %120 = arith.divf %118, %119 : vector<8x32xf32>
    %121 = vector.extract_strided_slice %114 {offsets = [0, 32], sizes = [8, 32], strides = [1, 1]} : vector<8x128xf32> to vector<8x32xf32>
    %122 = arith.negf %121 : vector<8x32xf32>
    %123 = math.exp %122 : vector<8x32xf32>
    %cst_38 = arith.constant 1.000000e+00 : f32
    %124 = vector.broadcast %cst_38 : f32 to vector<8x32xf32>
    %125 = arith.addf %124, %123 : vector<8x32xf32>
    %126 = arith.divf %124, %125 : vector<8x32xf32>
    %127 = vector.extract_strided_slice %114 {offsets = [0, 64], sizes = [8, 32], strides = [1, 1]} : vector<8x128xf32> to vector<8x32xf32>
    %128 = vector.extract_strided_slice %114 {offsets = [0, 96], sizes = [8, 32], strides = [1, 1]} : vector<8x128xf32> to vector<8x32xf32>
    %129 = arith.mulf %120, %128 : vector<8x32xf32>
    %130 = arith.addf %127, %129 : vector<8x32xf32>
    %131 = math.tanh %130 : vector<8x32xf32>
    %cst_39 = arith.constant 1.000000e+00 : f32
    %132 = vector.broadcast %cst_39 : f32 to vector<8x32xf32>
    %133 = arith.subf %132, %126 : vector<8x32xf32>
    %134 = arith.mulf %133, %131 : vector<8x32xf32>
    %135 = arith.mulf %126, %73 : vector<8x32xf32>
    %136 = arith.addf %134, %135 : vector<8x32xf32>
    %137 = arith.index_cast %c1_i32 : i32 to index
    %c0_40 = arith.constant 0 : index
    %c0_41 = arith.constant 0 : index
    %138 = vector.load %arg11[%137, %c0_40, %c0_41] : memref<8x8x32xf32, #tpu.memory_space<vmem>>, vector<1x8x32xf32>
    %139 = vector.shape_cast %138 : vector<1x8x32xf32> to vector<8x32xf32>
    %140 = vector.shape_cast %136 : vector<8x32xf32> to vector<1x8x32xf32>
    tpu.vector_store %arg11[%137, %c0_40, %c0_41], %140 {strides = array<i32>} : memref<8x8x32xf32, #tpu.memory_space<vmem>>, vector<1x8x32xf32>,
    %c2_i32 = arith.constant 2 : i32
    %c8_i32_42 = arith.constant 8 : i32
    %141 = arith.muli %c2_i32, %c8_i32_42 : i32
    %142 = tpu.assume_multiple %141, 8 : i32
    %143 = arith.index_cast %142 : i32 to index
    %c0_43 = arith.constant 0 : index
    %144 = vector.load %arg10[%143, %c0_43] : memref<64x96xf32, #tpu.memory_space<vmem>>, vector<8x96xf32>
    %cst_44 = arith.constant dense<0.000000e+00> : vector<8x96xf32>
    %145 = tpu.matmul %110, %7, %cst_44 {dimension_numbers = #tpu.dot_dimension_numbers<[1], [0], [0], [1], [0, 0, 1, 1], [], []>} : vector<8x32xf32>, vector<32x96xf32>, vector<8x96xf32> -> vector<8x96xf32>
    %146 = vector.extract_strided_slice %144 {offsets = [0, 0], sizes = [8, 32], strides = [1, 1]} : vector<8x96xf32> to vector<8x32xf32>
    %147 = vector.extract_strided_slice %145 {offsets = [0, 0], sizes = [8, 32], strides = [1, 1]} : vector<8x96xf32> to vector<8x32xf32>
    %148 = arith.addf %146, %147 : vector<8x32xf32>
    %149 = arith.negf %148 : vector<8x32xf32>
    %150 = math.exp %149 : vector<8x32xf32>
    %cst_45 = arith.constant 1.000000e+00 : f32
    %151 = vector.broadcast %cst_45 : f32 to vector<8x32xf32>
    %152 = arith.addf %151, %150 : vector<8x32xf32>
    %153 = arith.divf %151, %152 : vector<8x32xf32>
    %154 = vector.extract_strided_slice %144 {offsets = [0, 32], sizes = [8, 32], strides = [1, 1]} : vector<8x96xf32> to vector<8x32xf32>
    %155 = vector.extract_strided_slice %145 {offsets = [0, 32], sizes = [8, 32], strides = [1, 1]} : vector<8x96xf32> to vector<8x32xf32>
    %156 = arith.addf %154, %155 : vector<8x32xf32>
    %157 = arith.negf %156 : vector<8x32xf32>
    %158 = math.exp %157 : vector<8x32xf32>
    %cst_46 = arith.constant 1.000000e+00 : f32
    %159 = vector.broadcast %cst_46 : f32 to vector<8x32xf32>
    %160 = arith.addf %159, %158 : vector<8x32xf32>
    %161 = arith.divf %159, %160 : vector<8x32xf32>
    %162 = vector.extract_strided_slice %144 {offsets = [0, 64], sizes = [8, 32], strides = [1, 1]} : vector<8x96xf32> to vector<8x32xf32>
    %163 = vector.extract_strided_slice %145 {offsets = [0, 64], sizes = [8, 32], strides = [1, 1]} : vector<8x96xf32> to vector<8x32xf32>
    %164 = vector.broadcast %8 : vector<1x32xf32> to vector<8x32xf32>
    %165 = arith.addf %163, %164 : vector<8x32xf32>
    %166 = arith.mulf %153, %165 : vector<8x32xf32>
    %167 = arith.addf %162, %166 : vector<8x32xf32>
    %168 = math.tanh %167 : vector<8x32xf32>
    %cst_47 = arith.constant 1.000000e+00 : f32
    %169 = vector.broadcast %cst_47 : f32 to vector<8x32xf32>
    %170 = arith.subf %169, %161 : vector<8x32xf32>
    %171 = arith.mulf %170, %168 : vector<8x32xf32>
    %172 = arith.mulf %161, %110 : vector<8x32xf32>
    %173 = arith.addf %171, %172 : vector<8x32xf32>
    %174 = tpu.concatenate %173, %136 in 1 : vector<8x32xf32>, vector<8x32xf32> -> vector<8x64xf32>
    %cst_48 = arith.constant dense<0.000000e+00> : vector<8x128xf32>
    %175 = tpu.matmul %174, %10, %cst_48 {dimension_numbers = #tpu.dot_dimension_numbers<[1], [0], [0], [1], [0, 0, 1, 1], [], []>} : vector<8x64xf32>, vector<64x128xf32>, vector<8x128xf32> -> vector<8x128xf32>
    %176 = vector.broadcast %12 : vector<1x128xf32> to vector<8x128xf32>
    %177 = arith.addf %175, %176 : vector<8x128xf32>
    %178 = vector.extract_strided_slice %177 {offsets = [0, 0], sizes = [8, 32], strides = [1, 1]} : vector<8x128xf32> to vector<8x32xf32>
    %179 = arith.negf %178 : vector<8x32xf32>
    %180 = math.exp %179 : vector<8x32xf32>
    %cst_49 = arith.constant 1.000000e+00 : f32
    %181 = vector.broadcast %cst_49 : f32 to vector<8x32xf32>
    %182 = arith.addf %181, %180 : vector<8x32xf32>
    %183 = arith.divf %181, %182 : vector<8x32xf32>
    %184 = vector.extract_strided_slice %177 {offsets = [0, 32], sizes = [8, 32], strides = [1, 1]} : vector<8x128xf32> to vector<8x32xf32>
    %185 = arith.negf %184 : vector<8x32xf32>
    %186 = math.exp %185 : vector<8x32xf32>
    %cst_50 = arith.constant 1.000000e+00 : f32
    %187 = vector.broadcast %cst_50 : f32 to vector<8x32xf32>
    %188 = arith.addf %187, %186 : vector<8x32xf32>
    %189 = arith.divf %187, %188 : vector<8x32xf32>
    %190 = vector.extract_strided_slice %177 {offsets = [0, 64], sizes = [8, 32], strides = [1, 1]} : vector<8x128xf32> to vector<8x32xf32>
    %191 = vector.extract_strided_slice %177 {offsets = [0, 96], sizes = [8, 32], strides = [1, 1]} : vector<8x128xf32> to vector<8x32xf32>
    %192 = arith.mulf %183, %191 : vector<8x32xf32>
    %193 = arith.addf %190, %192 : vector<8x32xf32>
    %194 = math.tanh %193 : vector<8x32xf32>
    %cst_51 = arith.constant 1.000000e+00 : f32
    %195 = vector.broadcast %cst_51 : f32 to vector<8x32xf32>
    %196 = arith.subf %195, %189 : vector<8x32xf32>
    %197 = arith.mulf %196, %194 : vector<8x32xf32>
    %198 = arith.mulf %189, %136 : vector<8x32xf32>
    %199 = arith.addf %197, %198 : vector<8x32xf32>
    %200 = arith.index_cast %c2_i32 : i32 to index
    %c0_52 = arith.constant 0 : index
    %c0_53 = arith.constant 0 : index
    %201 = vector.load %arg11[%200, %c0_52, %c0_53] : memref<8x8x32xf32, #tpu.memory_space<vmem>>, vector<1x8x32xf32>
    %202 = vector.shape_cast %201 : vector<1x8x32xf32> to vector<8x32xf32>
    %203 = vector.shape_cast %199 : vector<8x32xf32> to vector<1x8x32xf32>
    tpu.vector_store %arg11[%200, %c0_52, %c0_53], %203 {strides = array<i32>} : memref<8x8x32xf32, #tpu.memory_space<vmem>>, vector<1x8x32xf32>,
    %c3_i32 = arith.constant 3 : i32
    %c8_i32_54 = arith.constant 8 : i32
    %204 = arith.muli %c3_i32, %c8_i32_54 : i32
    %205 = tpu.assume_multiple %204, 8 : i32
    %206 = arith.index_cast %205 : i32 to index
    %c0_55 = arith.constant 0 : index
    %207 = vector.load %arg10[%206, %c0_55] : memref<64x96xf32, #tpu.memory_space<vmem>>, vector<8x96xf32>
    %cst_56 = arith.constant dense<0.000000e+00> : vector<8x96xf32>
    %208 = tpu.matmul %173, %7, %cst_56 {dimension_numbers = #tpu.dot_dimension_numbers<[1], [0], [0], [1], [0, 0, 1, 1], [], []>} : vector<8x32xf32>, vector<32x96xf32>, vector<8x96xf32> -> vector<8x96xf32>
    %209 = vector.extract_strided_slice %207 {offsets = [0, 0], sizes = [8, 32], strides = [1, 1]} : vector<8x96xf32> to vector<8x32xf32>
    %210 = vector.extract_strided_slice %208 {offsets = [0, 0], sizes = [8, 32], strides = [1, 1]} : vector<8x96xf32> to vector<8x32xf32>
    %211 = arith.addf %209, %210 : vector<8x32xf32>
    %212 = arith.negf %211 : vector<8x32xf32>
    %213 = math.exp %212 : vector<8x32xf32>
    %cst_57 = arith.constant 1.000000e+00 : f32
    %214 = vector.broadcast %cst_57 : f32 to vector<8x32xf32>
    %215 = arith.addf %214, %213 : vector<8x32xf32>
    %216 = arith.divf %214, %215 : vector<8x32xf32>
    %217 = vector.extract_strided_slice %207 {offsets = [0, 32], sizes = [8, 32], strides = [1, 1]} : vector<8x96xf32> to vector<8x32xf32>
    %218 = vector.extract_strided_slice %208 {offsets = [0, 32], sizes = [8, 32], strides = [1, 1]} : vector<8x96xf32> to vector<8x32xf32>
    %219 = arith.addf %217, %218 : vector<8x32xf32>
    %220 = arith.negf %219 : vector<8x32xf32>
    %221 = math.exp %220 : vector<8x32xf32>
    %cst_58 = arith.constant 1.000000e+00 : f32
    %222 = vector.broadcast %cst_58 : f32 to vector<8x32xf32>
    %223 = arith.addf %222, %221 : vector<8x32xf32>
    %224 = arith.divf %222, %223 : vector<8x32xf32>
    %225 = vector.extract_strided_slice %207 {offsets = [0, 64], sizes = [8, 32], strides = [1, 1]} : vector<8x96xf32> to vector<8x32xf32>
    %226 = vector.extract_strided_slice %208 {offsets = [0, 64], sizes = [8, 32], strides = [1, 1]} : vector<8x96xf32> to vector<8x32xf32>
    %227 = vector.broadcast %8 : vector<1x32xf32> to vector<8x32xf32>
    %228 = arith.addf %226, %227 : vector<8x32xf32>
    %229 = arith.mulf %216, %228 : vector<8x32xf32>
    %230 = arith.addf %225, %229 : vector<8x32xf32>
    %231 = math.tanh %230 : vector<8x32xf32>
    %cst_59 = arith.constant 1.000000e+00 : f32
    %232 = vector.broadcast %cst_59 : f32 to vector<8x32xf32>
    %233 = arith.subf %232, %224 : vector<8x32xf32>
    %234 = arith.mulf %233, %231 : vector<8x32xf32>
    %235 = arith.mulf %224, %173 : vector<8x32xf32>
    %236 = arith.addf %234, %235 : vector<8x32xf32>
    %237 = tpu.concatenate %236, %199 in 1 : vector<8x32xf32>, vector<8x32xf32> -> vector<8x64xf32>
    %cst_60 = arith.constant dense<0.000000e+00> : vector<8x128xf32>
    %238 = tpu.matmul %237, %10, %cst_60 {dimension_numbers = #tpu.dot_dimension_numbers<[1], [0], [0], [1], [0, 0, 1, 1], [], []>} : vector<8x64xf32>, vector<64x128xf32>, vector<8x128xf32> -> vector<8x128xf32>
    %239 = vector.broadcast %12 : vector<1x128xf32> to vector<8x128xf32>
    %240 = arith.addf %238, %239 : vector<8x128xf32>
    %241 = vector.extract_strided_slice %240 {offsets = [0, 0], sizes = [8, 32], strides = [1, 1]} : vector<8x128xf32> to vector<8x32xf32>
    %242 = arith.negf %241 : vector<8x32xf32>
    %243 = math.exp %242 : vector<8x32xf32>
    %cst_61 = arith.constant 1.000000e+00 : f32
    %244 = vector.broadcast %cst_61 : f32 to vector<8x32xf32>
    %245 = arith.addf %244, %243 : vector<8x32xf32>
    %246 = arith.divf %244, %245 : vector<8x32xf32>
    %247 = vector.extract_strided_slice %240 {offsets = [0, 32], sizes = [8, 32], strides = [1, 1]} : vector<8x128xf32> to vector<8x32xf32>
    %248 = arith.negf %247 : vector<8x32xf32>
    %249 = math.exp %248 : vector<8x32xf32>
    %cst_62 = arith.constant 1.000000e+00 : f32
    %250 = vector.broadcast %cst_62 : f32 to vector<8x32xf32>
    %251 = arith.addf %250, %249 : vector<8x32xf32>
    %252 = arith.divf %250, %251 : vector<8x32xf32>
    %253 = vector.extract_strided_slice %240 {offsets = [0, 64], sizes = [8, 32], strides = [1, 1]} : vector<8x128xf32> to vector<8x32xf32>
    %254 = vector.extract_strided_slice %240 {offsets = [0, 96], sizes = [8, 32], strides = [1, 1]} : vector<8x128xf32> to vector<8x32xf32>
    %255 = arith.mulf %246, %254 : vector<8x32xf32>
    %256 = arith.addf %253, %255 : vector<8x32xf32>
    %257 = math.tanh %256 : vector<8x32xf32>
    %cst_63 = arith.constant 1.000000e+00 : f32
    %258 = vector.broadcast %cst_63 : f32 to vector<8x32xf32>
    %259 = arith.subf %258, %252 : vector<8x32xf32>
    %260 = arith.mulf %259, %257 : vector<8x32xf32>
    %261 = arith.mulf %252, %199 : vector<8x32xf32>
    %262 = arith.addf %260, %261 : vector<8x32xf32>
    %263 = arith.index_cast %c3_i32 : i32 to index
    %c0_64 = arith.constant 0 : index
    %c0_65 = arith.constant 0 : index
    %264 = vector.load %arg11[%263, %c0_64, %c0_65] : memref<8x8x32xf32, #tpu.memory_space<vmem>>, vector<1x8x32xf32>
    %265 = vector.shape_cast %264 : vector<1x8x32xf32> to vector<8x32xf32>
    %266 = vector.shape_cast %262 : vector<8x32xf32> to vector<1x8x32xf32>
    tpu.vector_store %arg11[%263, %c0_64, %c0_65], %266 {strides = array<i32>} : memref<8x8x32xf32, #tpu.memory_space<vmem>>, vector<1x8x32xf32>,
    %c4_i32 = arith.constant 4 : i32
    %c8_i32_66 = arith.constant 8 : i32
    %267 = arith.muli %c4_i32, %c8_i32_66 : i32
    %268 = tpu.assume_multiple %267, 8 : i32
    %269 = arith.index_cast %268 : i32 to index
    %c0_67 = arith.constant 0 : index
    %270 = vector.load %arg10[%269, %c0_67] : memref<64x96xf32, #tpu.memory_space<vmem>>, vector<8x96xf32>
    %cst_68 = arith.constant dense<0.000000e+00> : vector<8x96xf32>
    %271 = tpu.matmul %236, %7, %cst_68 {dimension_numbers = #tpu.dot_dimension_numbers<[1], [0], [0], [1], [0, 0, 1, 1], [], []>} : vector<8x32xf32>, vector<32x96xf32>, vector<8x96xf32> -> vector<8x96xf32>
    %272 = vector.extract_strided_slice %270 {offsets = [0, 0], sizes = [8, 32], strides = [1, 1]} : vector<8x96xf32> to vector<8x32xf32>
    %273 = vector.extract_strided_slice %271 {offsets = [0, 0], sizes = [8, 32], strides = [1, 1]} : vector<8x96xf32> to vector<8x32xf32>
    %274 = arith.addf %272, %273 : vector<8x32xf32>
    %275 = arith.negf %274 : vector<8x32xf32>
    %276 = math.exp %275 : vector<8x32xf32>
    %cst_69 = arith.constant 1.000000e+00 : f32
    %277 = vector.broadcast %cst_69 : f32 to vector<8x32xf32>
    %278 = arith.addf %277, %276 : vector<8x32xf32>
    %279 = arith.divf %277, %278 : vector<8x32xf32>
    %280 = vector.extract_strided_slice %270 {offsets = [0, 32], sizes = [8, 32], strides = [1, 1]} : vector<8x96xf32> to vector<8x32xf32>
    %281 = vector.extract_strided_slice %271 {offsets = [0, 32], sizes = [8, 32], strides = [1, 1]} : vector<8x96xf32> to vector<8x32xf32>
    %282 = arith.addf %280, %281 : vector<8x32xf32>
    %283 = arith.negf %282 : vector<8x32xf32>
    %284 = math.exp %283 : vector<8x32xf32>
    %cst_70 = arith.constant 1.000000e+00 : f32
    %285 = vector.broadcast %cst_70 : f32 to vector<8x32xf32>
    %286 = arith.addf %285, %284 : vector<8x32xf32>
    %287 = arith.divf %285, %286 : vector<8x32xf32>
    %288 = vector.extract_strided_slice %270 {offsets = [0, 64], sizes = [8, 32], strides = [1, 1]} : vector<8x96xf32> to vector<8x32xf32>
    %289 = vector.extract_strided_slice %271 {offsets = [0, 64], sizes = [8, 32], strides = [1, 1]} : vector<8x96xf32> to vector<8x32xf32>
    %290 = vector.broadcast %8 : vector<1x32xf32> to vector<8x32xf32>
    %291 = arith.addf %289, %290 : vector<8x32xf32>
    %292 = arith.mulf %279, %291 : vector<8x32xf32>
    %293 = arith.addf %288, %292 : vector<8x32xf32>
    %294 = math.tanh %293 : vector<8x32xf32>
    %cst_71 = arith.constant 1.000000e+00 : f32
    %295 = vector.broadcast %cst_71 : f32 to vector<8x32xf32>
    %296 = arith.subf %295, %287 : vector<8x32xf32>
    %297 = arith.mulf %296, %294 : vector<8x32xf32>
    %298 = arith.mulf %287, %236 : vector<8x32xf32>
    %299 = arith.addf %297, %298 : vector<8x32xf32>
    %300 = tpu.concatenate %299, %262 in 1 : vector<8x32xf32>, vector<8x32xf32> -> vector<8x64xf32>
    %cst_72 = arith.constant dense<0.000000e+00> : vector<8x128xf32>
    %301 = tpu.matmul %300, %10, %cst_72 {dimension_numbers = #tpu.dot_dimension_numbers<[1], [0], [0], [1], [0, 0, 1, 1], [], []>} : vector<8x64xf32>, vector<64x128xf32>, vector<8x128xf32> -> vector<8x128xf32>
    %302 = vector.broadcast %12 : vector<1x128xf32> to vector<8x128xf32>
    %303 = arith.addf %301, %302 : vector<8x128xf32>
    %304 = vector.extract_strided_slice %303 {offsets = [0, 0], sizes = [8, 32], strides = [1, 1]} : vector<8x128xf32> to vector<8x32xf32>
    %305 = arith.negf %304 : vector<8x32xf32>
    %306 = math.exp %305 : vector<8x32xf32>
    %cst_73 = arith.constant 1.000000e+00 : f32
    %307 = vector.broadcast %cst_73 : f32 to vector<8x32xf32>
    %308 = arith.addf %307, %306 : vector<8x32xf32>
    %309 = arith.divf %307, %308 : vector<8x32xf32>
    %310 = vector.extract_strided_slice %303 {offsets = [0, 32], sizes = [8, 32], strides = [1, 1]} : vector<8x128xf32> to vector<8x32xf32>
    %311 = arith.negf %310 : vector<8x32xf32>
    %312 = math.exp %311 : vector<8x32xf32>
    %cst_74 = arith.constant 1.000000e+00 : f32
    %313 = vector.broadcast %cst_74 : f32 to vector<8x32xf32>
    %314 = arith.addf %313, %312 : vector<8x32xf32>
    %315 = arith.divf %313, %314 : vector<8x32xf32>
    %316 = vector.extract_strided_slice %303 {offsets = [0, 64], sizes = [8, 32], strides = [1, 1]} : vector<8x128xf32> to vector<8x32xf32>
    %317 = vector.extract_strided_slice %303 {offsets = [0, 96], sizes = [8, 32], strides = [1, 1]} : vector<8x128xf32> to vector<8x32xf32>
    %318 = arith.mulf %309, %317 : vector<8x32xf32>
    %319 = arith.addf %316, %318 : vector<8x32xf32>
    %320 = math.tanh %319 : vector<8x32xf32>
    %cst_75 = arith.constant 1.000000e+00 : f32
    %321 = vector.broadcast %cst_75 : f32 to vector<8x32xf32>
    %322 = arith.subf %321, %315 : vector<8x32xf32>
    %323 = arith.mulf %322, %320 : vector<8x32xf32>
    %324 = arith.mulf %315, %262 : vector<8x32xf32>
    %325 = arith.addf %323, %324 : vector<8x32xf32>
    %326 = arith.index_cast %c4_i32 : i32 to index
    %c0_76 = arith.constant 0 : index
    %c0_77 = arith.constant 0 : index
    %327 = vector.load %arg11[%326, %c0_76, %c0_77] : memref<8x8x32xf32, #tpu.memory_space<vmem>>, vector<1x8x32xf32>
    %328 = vector.shape_cast %327 : vector<1x8x32xf32> to vector<8x32xf32>
    %329 = vector.shape_cast %325 : vector<8x32xf32> to vector<1x8x32xf32>
    tpu.vector_store %arg11[%326, %c0_76, %c0_77], %329 {strides = array<i32>} : memref<8x8x32xf32, #tpu.memory_space<vmem>>, vector<1x8x32xf32>,
    %c5_i32 = arith.constant 5 : i32
    %c8_i32_78 = arith.constant 8 : i32
    %330 = arith.muli %c5_i32, %c8_i32_78 : i32
    %331 = tpu.assume_multiple %330, 8 : i32
    %332 = arith.index_cast %331 : i32 to index
    %c0_79 = arith.constant 0 : index
    %333 = vector.load %arg10[%332, %c0_79] : memref<64x96xf32, #tpu.memory_space<vmem>>, vector<8x96xf32>
    %cst_80 = arith.constant dense<0.000000e+00> : vector<8x96xf32>
    %334 = tpu.matmul %299, %7, %cst_80 {dimension_numbers = #tpu.dot_dimension_numbers<[1], [0], [0], [1], [0, 0, 1, 1], [], []>} : vector<8x32xf32>, vector<32x96xf32>, vector<8x96xf32> -> vector<8x96xf32>
    %335 = vector.extract_strided_slice %333 {offsets = [0, 0], sizes = [8, 32], strides = [1, 1]} : vector<8x96xf32> to vector<8x32xf32>
    %336 = vector.extract_strided_slice %334 {offsets = [0, 0], sizes = [8, 32], strides = [1, 1]} : vector<8x96xf32> to vector<8x32xf32>
    %337 = arith.addf %335, %336 : vector<8x32xf32>
    %338 = arith.negf %337 : vector<8x32xf32>
    %339 = math.exp %338 : vector<8x32xf32>
    %cst_81 = arith.constant 1.000000e+00 : f32
    %340 = vector.broadcast %cst_81 : f32 to vector<8x32xf32>
    %341 = arith.addf %340, %339 : vector<8x32xf32>
    %342 = arith.divf %340, %341 : vector<8x32xf32>
    %343 = vector.extract_strided_slice %333 {offsets = [0, 32], sizes = [8, 32], strides = [1, 1]} : vector<8x96xf32> to vector<8x32xf32>
    %344 = vector.extract_strided_slice %334 {offsets = [0, 32], sizes = [8, 32], strides = [1, 1]} : vector<8x96xf32> to vector<8x32xf32>
    %345 = arith.addf %343, %344 : vector<8x32xf32>
    %346 = arith.negf %345 : vector<8x32xf32>
    %347 = math.exp %346 : vector<8x32xf32>
    %cst_82 = arith.constant 1.000000e+00 : f32
    %348 = vector.broadcast %cst_82 : f32 to vector<8x32xf32>
    %349 = arith.addf %348, %347 : vector<8x32xf32>
    %350 = arith.divf %348, %349 : vector<8x32xf32>
    %351 = vector.extract_strided_slice %333 {offsets = [0, 64], sizes = [8, 32], strides = [1, 1]} : vector<8x96xf32> to vector<8x32xf32>
    %352 = vector.extract_strided_slice %334 {offsets = [0, 64], sizes = [8, 32], strides = [1, 1]} : vector<8x96xf32> to vector<8x32xf32>
    %353 = vector.broadcast %8 : vector<1x32xf32> to vector<8x32xf32>
    %354 = arith.addf %352, %353 : vector<8x32xf32>
    %355 = arith.mulf %342, %354 : vector<8x32xf32>
    %356 = arith.addf %351, %355 : vector<8x32xf32>
    %357 = math.tanh %356 : vector<8x32xf32>
    %cst_83 = arith.constant 1.000000e+00 : f32
    %358 = vector.broadcast %cst_83 : f32 to vector<8x32xf32>
    %359 = arith.subf %358, %350 : vector<8x32xf32>
    %360 = arith.mulf %359, %357 : vector<8x32xf32>
    %361 = arith.mulf %350, %299 : vector<8x32xf32>
    %362 = arith.addf %360, %361 : vector<8x32xf32>
    %363 = tpu.concatenate %362, %325 in 1 : vector<8x32xf32>, vector<8x32xf32> -> vector<8x64xf32>
    %cst_84 = arith.constant dense<0.000000e+00> : vector<8x128xf32>
    %364 = tpu.matmul %363, %10, %cst_84 {dimension_numbers = #tpu.dot_dimension_numbers<[1], [0], [0], [1], [0, 0, 1, 1], [], []>} : vector<8x64xf32>, vector<64x128xf32>, vector<8x128xf32> -> vector<8x128xf32>
    %365 = vector.broadcast %12 : vector<1x128xf32> to vector<8x128xf32>
    %366 = arith.addf %364, %365 : vector<8x128xf32>
    %367 = vector.extract_strided_slice %366 {offsets = [0, 0], sizes = [8, 32], strides = [1, 1]} : vector<8x128xf32> to vector<8x32xf32>
    %368 = arith.negf %367 : vector<8x32xf32>
    %369 = math.exp %368 : vector<8x32xf32>
    %cst_85 = arith.constant 1.000000e+00 : f32
    %370 = vector.broadcast %cst_85 : f32 to vector<8x32xf32>
    %371 = arith.addf %370, %369 : vector<8x32xf32>
    %372 = arith.divf %370, %371 : vector<8x32xf32>
    %373 = vector.extract_strided_slice %366 {offsets = [0, 32], sizes = [8, 32], strides = [1, 1]} : vector<8x128xf32> to vector<8x32xf32>
    %374 = arith.negf %373 : vector<8x32xf32>
    %375 = math.exp %374 : vector<8x32xf32>
    %cst_86 = arith.constant 1.000000e+00 : f32
    %376 = vector.broadcast %cst_86 : f32 to vector<8x32xf32>
    %377 = arith.addf %376, %375 : vector<8x32xf32>
    %378 = arith.divf %376, %377 : vector<8x32xf32>
    %379 = vector.extract_strided_slice %366 {offsets = [0, 64], sizes = [8, 32], strides = [1, 1]} : vector<8x128xf32> to vector<8x32xf32>
    %380 = vector.extract_strided_slice %366 {offsets = [0, 96], sizes = [8, 32], strides = [1, 1]} : vector<8x128xf32> to vector<8x32xf32>
    %381 = arith.mulf %372, %380 : vector<8x32xf32>
    %382 = arith.addf %379, %381 : vector<8x32xf32>
    %383 = math.tanh %382 : vector<8x32xf32>
    %cst_87 = arith.constant 1.000000e+00 : f32
    %384 = vector.broadcast %cst_87 : f32 to vector<8x32xf32>
    %385 = arith.subf %384, %378 : vector<8x32xf32>
    %386 = arith.mulf %385, %383 : vector<8x32xf32>
    %387 = arith.mulf %378, %325 : vector<8x32xf32>
    %388 = arith.addf %386, %387 : vector<8x32xf32>
    %389 = arith.index_cast %c5_i32 : i32 to index
    %c0_88 = arith.constant 0 : index
    %c0_89 = arith.constant 0 : index
    %390 = vector.load %arg11[%389, %c0_88, %c0_89] : memref<8x8x32xf32, #tpu.memory_space<vmem>>, vector<1x8x32xf32>
    %391 = vector.shape_cast %390 : vector<1x8x32xf32> to vector<8x32xf32>
    %392 = vector.shape_cast %388 : vector<8x32xf32> to vector<1x8x32xf32>
    tpu.vector_store %arg11[%389, %c0_88, %c0_89], %392 {strides = array<i32>} : memref<8x8x32xf32, #tpu.memory_space<vmem>>, vector<1x8x32xf32>,
    %c6_i32 = arith.constant 6 : i32
    %c8_i32_90 = arith.constant 8 : i32
    %393 = arith.muli %c6_i32, %c8_i32_90 : i32
    %394 = tpu.assume_multiple %393, 8 : i32
    %395 = arith.index_cast %394 : i32 to index
    %c0_91 = arith.constant 0 : index
    %396 = vector.load %arg10[%395, %c0_91] : memref<64x96xf32, #tpu.memory_space<vmem>>, vector<8x96xf32>
    %cst_92 = arith.constant dense<0.000000e+00> : vector<8x96xf32>
    %397 = tpu.matmul %362, %7, %cst_92 {dimension_numbers = #tpu.dot_dimension_numbers<[1], [0], [0], [1], [0, 0, 1, 1], [], []>} : vector<8x32xf32>, vector<32x96xf32>, vector<8x96xf32> -> vector<8x96xf32>
    %398 = vector.extract_strided_slice %396 {offsets = [0, 0], sizes = [8, 32], strides = [1, 1]} : vector<8x96xf32> to vector<8x32xf32>
    %399 = vector.extract_strided_slice %397 {offsets = [0, 0], sizes = [8, 32], strides = [1, 1]} : vector<8x96xf32> to vector<8x32xf32>
    %400 = arith.addf %398, %399 : vector<8x32xf32>
    %401 = arith.negf %400 : vector<8x32xf32>
    %402 = math.exp %401 : vector<8x32xf32>
    %cst_93 = arith.constant 1.000000e+00 : f32
    %403 = vector.broadcast %cst_93 : f32 to vector<8x32xf32>
    %404 = arith.addf %403, %402 : vector<8x32xf32>
    %405 = arith.divf %403, %404 : vector<8x32xf32>
    %406 = vector.extract_strided_slice %396 {offsets = [0, 32], sizes = [8, 32], strides = [1, 1]} : vector<8x96xf32> to vector<8x32xf32>
    %407 = vector.extract_strided_slice %397 {offsets = [0, 32], sizes = [8, 32], strides = [1, 1]} : vector<8x96xf32> to vector<8x32xf32>
    %408 = arith.addf %406, %407 : vector<8x32xf32>
    %409 = arith.negf %408 : vector<8x32xf32>
    %410 = math.exp %409 : vector<8x32xf32>
    %cst_94 = arith.constant 1.000000e+00 : f32
    %411 = vector.broadcast %cst_94 : f32 to vector<8x32xf32>
    %412 = arith.addf %411, %410 : vector<8x32xf32>
    %413 = arith.divf %411, %412 : vector<8x32xf32>
    %414 = vector.extract_strided_slice %396 {offsets = [0, 64], sizes = [8, 32], strides = [1, 1]} : vector<8x96xf32> to vector<8x32xf32>
    %415 = vector.extract_strided_slice %397 {offsets = [0, 64], sizes = [8, 32], strides = [1, 1]} : vector<8x96xf32> to vector<8x32xf32>
    %416 = vector.broadcast %8 : vector<1x32xf32> to vector<8x32xf32>
    %417 = arith.addf %415, %416 : vector<8x32xf32>
    %418 = arith.mulf %405, %417 : vector<8x32xf32>
    %419 = arith.addf %414, %418 : vector<8x32xf32>
    %420 = math.tanh %419 : vector<8x32xf32>
    %cst_95 = arith.constant 1.000000e+00 : f32
    %421 = vector.broadcast %cst_95 : f32 to vector<8x32xf32>
    %422 = arith.subf %421, %413 : vector<8x32xf32>
    %423 = arith.mulf %422, %420 : vector<8x32xf32>
    %424 = arith.mulf %413, %362 : vector<8x32xf32>
    %425 = arith.addf %423, %424 : vector<8x32xf32>
    %426 = tpu.concatenate %425, %388 in 1 : vector<8x32xf32>, vector<8x32xf32> -> vector<8x64xf32>
    %cst_96 = arith.constant dense<0.000000e+00> : vector<8x128xf32>
    %427 = tpu.matmul %426, %10, %cst_96 {dimension_numbers = #tpu.dot_dimension_numbers<[1], [0], [0], [1], [0, 0, 1, 1], [], []>} : vector<8x64xf32>, vector<64x128xf32>, vector<8x128xf32> -> vector<8x128xf32>
    %428 = vector.broadcast %12 : vector<1x128xf32> to vector<8x128xf32>
    %429 = arith.addf %427, %428 : vector<8x128xf32>
    %430 = vector.extract_strided_slice %429 {offsets = [0, 0], sizes = [8, 32], strides = [1, 1]} : vector<8x128xf32> to vector<8x32xf32>
    %431 = arith.negf %430 : vector<8x32xf32>
    %432 = math.exp %431 : vector<8x32xf32>
    %cst_97 = arith.constant 1.000000e+00 : f32
    %433 = vector.broadcast %cst_97 : f32 to vector<8x32xf32>
    %434 = arith.addf %433, %432 : vector<8x32xf32>
    %435 = arith.divf %433, %434 : vector<8x32xf32>
    %436 = vector.extract_strided_slice %429 {offsets = [0, 32], sizes = [8, 32], strides = [1, 1]} : vector<8x128xf32> to vector<8x32xf32>
    %437 = arith.negf %436 : vector<8x32xf32>
    %438 = math.exp %437 : vector<8x32xf32>
    %cst_98 = arith.constant 1.000000e+00 : f32
    %439 = vector.broadcast %cst_98 : f32 to vector<8x32xf32>
    %440 = arith.addf %439, %438 : vector<8x32xf32>
    %441 = arith.divf %439, %440 : vector<8x32xf32>
    %442 = vector.extract_strided_slice %429 {offsets = [0, 64], sizes = [8, 32], strides = [1, 1]} : vector<8x128xf32> to vector<8x32xf32>
    %443 = vector.extract_strided_slice %429 {offsets = [0, 96], sizes = [8, 32], strides = [1, 1]} : vector<8x128xf32> to vector<8x32xf32>
    %444 = arith.mulf %435, %443 : vector<8x32xf32>
    %445 = arith.addf %442, %444 : vector<8x32xf32>
    %446 = math.tanh %445 : vector<8x32xf32>
    %cst_99 = arith.constant 1.000000e+00 : f32
    %447 = vector.broadcast %cst_99 : f32 to vector<8x32xf32>
    %448 = arith.subf %447, %441 : vector<8x32xf32>
    %449 = arith.mulf %448, %446 : vector<8x32xf32>
    %450 = arith.mulf %441, %388 : vector<8x32xf32>
    %451 = arith.addf %449, %450 : vector<8x32xf32>
    %452 = arith.index_cast %c6_i32 : i32 to index
    %c0_100 = arith.constant 0 : index
    %c0_101 = arith.constant 0 : index
    %453 = vector.load %arg11[%452, %c0_100, %c0_101] : memref<8x8x32xf32, #tpu.memory_space<vmem>>, vector<1x8x32xf32>
    %454 = vector.shape_cast %453 : vector<1x8x32xf32> to vector<8x32xf32>
    %455 = vector.shape_cast %451 : vector<8x32xf32> to vector<1x8x32xf32>
    tpu.vector_store %arg11[%452, %c0_100, %c0_101], %455 {strides = array<i32>} : memref<8x8x32xf32, #tpu.memory_space<vmem>>, vector<1x8x32xf32>,
    %c7_i32 = arith.constant 7 : i32
    %c8_i32_102 = arith.constant 8 : i32
    %456 = arith.muli %c7_i32, %c8_i32_102 : i32
    %457 = tpu.assume_multiple %456, 8 : i32
    %458 = arith.index_cast %457 : i32 to index
    %c0_103 = arith.constant 0 : index
    %459 = vector.load %arg10[%458, %c0_103] : memref<64x96xf32, #tpu.memory_space<vmem>>, vector<8x96xf32>
    %cst_104 = arith.constant dense<0.000000e+00> : vector<8x96xf32>
    %460 = tpu.matmul %425, %7, %cst_104 {dimension_numbers = #tpu.dot_dimension_numbers<[1], [0], [0], [1], [0, 0, 1, 1], [], []>} : vector<8x32xf32>, vector<32x96xf32>, vector<8x96xf32> -> vector<8x96xf32>
    %461 = vector.extract_strided_slice %459 {offsets = [0, 0], sizes = [8, 32], strides = [1, 1]} : vector<8x96xf32> to vector<8x32xf32>
    %462 = vector.extract_strided_slice %460 {offsets = [0, 0], sizes = [8, 32], strides = [1, 1]} : vector<8x96xf32> to vector<8x32xf32>
    %463 = arith.addf %461, %462 : vector<8x32xf32>
    %464 = arith.negf %463 : vector<8x32xf32>
    %465 = math.exp %464 : vector<8x32xf32>
    %cst_105 = arith.constant 1.000000e+00 : f32
    %466 = vector.broadcast %cst_105 : f32 to vector<8x32xf32>
    %467 = arith.addf %466, %465 : vector<8x32xf32>
    %468 = arith.divf %466, %467 : vector<8x32xf32>
    %469 = vector.extract_strided_slice %459 {offsets = [0, 32], sizes = [8, 32], strides = [1, 1]} : vector<8x96xf32> to vector<8x32xf32>
    %470 = vector.extract_strided_slice %460 {offsets = [0, 32], sizes = [8, 32], strides = [1, 1]} : vector<8x96xf32> to vector<8x32xf32>
    %471 = arith.addf %469, %470 : vector<8x32xf32>
    %472 = arith.negf %471 : vector<8x32xf32>
    %473 = math.exp %472 : vector<8x32xf32>
    %cst_106 = arith.constant 1.000000e+00 : f32
    %474 = vector.broadcast %cst_106 : f32 to vector<8x32xf32>
    %475 = arith.addf %474, %473 : vector<8x32xf32>
    %476 = arith.divf %474, %475 : vector<8x32xf32>
    %477 = vector.extract_strided_slice %459 {offsets = [0, 64], sizes = [8, 32], strides = [1, 1]} : vector<8x96xf32> to vector<8x32xf32>
    %478 = vector.extract_strided_slice %460 {offsets = [0, 64], sizes = [8, 32], strides = [1, 1]} : vector<8x96xf32> to vector<8x32xf32>
    %479 = vector.broadcast %8 : vector<1x32xf32> to vector<8x32xf32>
    %480 = arith.addf %478, %479 : vector<8x32xf32>
    %481 = arith.mulf %468, %480 : vector<8x32xf32>
    %482 = arith.addf %477, %481 : vector<8x32xf32>
    %483 = math.tanh %482 : vector<8x32xf32>
    %cst_107 = arith.constant 1.000000e+00 : f32
    %484 = vector.broadcast %cst_107 : f32 to vector<8x32xf32>
    %485 = arith.subf %484, %476 : vector<8x32xf32>
    %486 = arith.mulf %485, %483 : vector<8x32xf32>
    %487 = arith.mulf %476, %425 : vector<8x32xf32>
    %488 = arith.addf %486, %487 : vector<8x32xf32>
    %489 = tpu.concatenate %488, %451 in 1 : vector<8x32xf32>, vector<8x32xf32> -> vector<8x64xf32>
    %cst_108 = arith.constant dense<0.000000e+00> : vector<8x128xf32>
    %490 = tpu.matmul %489, %10, %cst_108 {dimension_numbers = #tpu.dot_dimension_numbers<[1], [0], [0], [1], [0, 0, 1, 1], [], []>} : vector<8x64xf32>, vector<64x128xf32>, vector<8x128xf32> -> vector<8x128xf32>
    %491 = vector.broadcast %12 : vector<1x128xf32> to vector<8x128xf32>
    %492 = arith.addf %490, %491 : vector<8x128xf32>
    %493 = vector.extract_strided_slice %492 {offsets = [0, 0], sizes = [8, 32], strides = [1, 1]} : vector<8x128xf32> to vector<8x32xf32>
    %494 = arith.negf %493 : vector<8x32xf32>
    %495 = math.exp %494 : vector<8x32xf32>
    %cst_109 = arith.constant 1.000000e+00 : f32
    %496 = vector.broadcast %cst_109 : f32 to vector<8x32xf32>
    %497 = arith.addf %496, %495 : vector<8x32xf32>
    %498 = arith.divf %496, %497 : vector<8x32xf32>
    %499 = vector.extract_strided_slice %492 {offsets = [0, 32], sizes = [8, 32], strides = [1, 1]} : vector<8x128xf32> to vector<8x32xf32>
    %500 = arith.negf %499 : vector<8x32xf32>
    %501 = math.exp %500 : vector<8x32xf32>
    %cst_110 = arith.constant 1.000000e+00 : f32
    %502 = vector.broadcast %cst_110 : f32 to vector<8x32xf32>
    %503 = arith.addf %502, %501 : vector<8x32xf32>
    %504 = arith.divf %502, %503 : vector<8x32xf32>
    %505 = vector.extract_strided_slice %492 {offsets = [0, 64], sizes = [8, 32], strides = [1, 1]} : vector<8x128xf32> to vector<8x32xf32>
    %506 = vector.extract_strided_slice %492 {offsets = [0, 96], sizes = [8, 32], strides = [1, 1]} : vector<8x128xf32> to vector<8x32xf32>
    %507 = arith.mulf %498, %506 : vector<8x32xf32>
    %508 = arith.addf %505, %507 : vector<8x32xf32>
    %509 = math.tanh %508 : vector<8x32xf32>
    %cst_111 = arith.constant 1.000000e+00 : f32
    %510 = vector.broadcast %cst_111 : f32 to vector<8x32xf32>
    %511 = arith.subf %510, %504 : vector<8x32xf32>
    %512 = arith.mulf %511, %509 : vector<8x32xf32>
    %513 = arith.mulf %504, %451 : vector<8x32xf32>
    %514 = arith.addf %512, %513 : vector<8x32xf32>
    %515 = arith.index_cast %c7_i32 : i32 to index
    %c0_112 = arith.constant 0 : index
    %c0_113 = arith.constant 0 : index
    %516 = vector.load %arg11[%515, %c0_112, %c0_113] : memref<8x8x32xf32, #tpu.memory_space<vmem>>, vector<1x8x32xf32>
    %517 = vector.shape_cast %516 : vector<1x8x32xf32> to vector<8x32xf32>
    %518 = vector.shape_cast %514 : vector<8x32xf32> to vector<1x8x32xf32>
    tpu.vector_store %arg11[%515, %c0_112, %c0_113], %518 {strides = array<i32>} : memref<8x8x32xf32, #tpu.memory_space<vmem>>, vector<1x8x32xf32>,
    %c8_i32_114 = arith.constant 8 : i32
    %c0_115 = arith.constant 0 : index
    %c0_116 = arith.constant 0 : index
    %c0_117 = arith.constant 0 : index
    %519 = vector.load %arg11[%c0_115, %c0_116, %c0_117] : memref<8x8x32xf32, #tpu.memory_space<vmem>>, vector<8x8x32xf32>
    %c0_118 = arith.constant 0 : index
    %c0_119 = arith.constant 0 : index
    %520 = vector.load %arg7[%c0_118, %c0_119] : memref<1x32xf32, #tpu.memory_space<vmem>>, vector<1x32xf32>
    %521 = vector.shape_cast %520 : vector<1x32xf32> to vector<1x1x32xf32>
    %522 = vector.broadcast %521 : vector<1x1x32xf32> to vector<8x8x32xf32>
    %523 = arith.mulf %519, %522 : vector<8x8x32xf32>
    %cst_120 = arith.constant dense<0.000000e+00> : vector<8x8xf32>
    %524 = vector.multi_reduction <add>, %523, %cst_120 [2] : vector<8x8x32xf32> to vector<8x8xf32>
    %c0_121 = arith.constant 0 : index
    %c0_122 = arith.constant 0 : index
    %525 = vector.load %arg8[%c0_121, %c0_122] : memref<1x1xf32, #tpu.memory_space<vmem>>, vector<1x1xf32>
    %526 = vector.broadcast %525 : vector<1x1xf32> to vector<8x8xf32>
    %527 = arith.addf %524, %526 : vector<8x8xf32>
    %528 = arith.negf %527 : vector<8x8xf32>
    %529 = math.exp %528 : vector<8x8xf32>
    %cst_123 = arith.constant 1.000000e+00 : f32
    %530 = vector.broadcast %cst_123 : f32 to vector<8x8xf32>
    %531 = arith.addf %530, %529 : vector<8x8xf32>
    %532 = arith.divf %530, %531 : vector<8x8xf32>
    %c0_124 = arith.constant 0 : index
    %c0_125 = arith.constant 0 : index
    %533 = vector.load %arg9[%c0_124, %c0_125] : memref<8x8xf32, #tpu.memory_space<vmem>>, vector<8x8xf32>
    tpu.vector_store %arg9[%c0_124, %c0_125], %532 {strides = array<i32>} : memref<8x8xf32, #tpu.memory_space<vmem>>, vector<8x8xf32>,
    return
  }
}

</mosaic_0001>

<llo_original>
// kernel: tpu_custom_call.1
$region0: #{tpu_custom_call.1}
  #allocation0 [shape = 'u32[]', space=smem, size = 0x4, offset = 0x4, fixed_abs, tag = 'smem constant byte address 0x4 - core index']
  #allocation1 [shape = 'u32[144,128]{1,0:T(1,128)}', space=vmem, size = 0x12000, scoped, tag = 'internal scratch']
  #allocation2 [shape = 'f32[64,96]{1,0:T(8,128)}', space=vmem, size = 0x8000, scoped, tag = 'scratch operand']
  #allocation3 [shape = 'f32[8,8,32]{2,1,0:T(8,128)}', space=vmem, size = 0x8000, scoped, tag = 'scratch operand']
  #allocation4 [shape = 'f32[1,1]{1,0:T(1,128)S(1)}', space=vmem, size = 0x200, scoped, tag = 'scoped memory for tpu_custom_call.1']
  %s0 = inlined_call_operand.vmem [shape: f32[64,8], index: 0, kind: input, shape index: {}]
  %s1 = inlined_call_operand.vmem [shape: f32[8,96], index: 1, kind: input, shape index: {}]
  %s2 = inlined_call_operand.vmem [shape: f32[1,96], index: 2, kind: input, shape index: {}]
  %s3 = inlined_call_operand.hbm [shape: f32[32,96], index: 3, kind: input, shape index: {}]
  %s4 = inlined_call_operand.vmem [shape: f32[1,32], index: 4, kind: input, shape index: {}]
  %s5 = inlined_call_operand.vmem [shape: f32[1,64,128], index: 5, kind: input, shape index: {}]
  %s6 = inlined_call_operand.vmem [shape: f32[1,1,128], index: 6, kind: input, shape index: {}]
  %s7 = inlined_call_operand.vmem [shape: f32[1,32], index: 7, kind: input, shape index: {}]
  %s8 = inlined_call_operand.<no memory space> [shape: f32[1,1], index: 8, kind: input, shape index: {}]
  %s9 = inlined_call_operand.hbm [shape: f32[8,8], index: 9, kind: output, shape index: {}]
  %s10 = sld [smem:[#allocation0]]
  $region50: #{tpu_custom_call.1} parent=0
    _
  %s12 = ssub.s32 1, %s10
  %s13 = scalar_select 0, %s12, %s10
  %v14 = vstv %s8
  %15 = vst [vmem:[#allocation4] sm:$0x1] %v14
  $region1: #{tpu_custom_call.1} parent=0
    #allocation5 [shape = 'u8[16384]{0}', space=vmem, size = 0x4000, scoped, tag = 'input window, operand 3, single buffered']
    #allocation6 [shape = 's32[1]{0}', space=sflag, size = 0x4, scoped, tag = 'scoped memory for tpu_custom_call.1']
    #allocation7 [shape = 's32[1]{0}', space=sflag, size = 0x4, scoped, tag = 'scoped memory for tpu_custom_call.1']
    #allocation8 [shape = 'u8[4096]{0}', space=vmem, size = 0x1000, scoped, tag = 'output window, operand 0, single buffered']
    %16 = vsyncpa [#allocation6], 0
    %17 = vsyncpa [#allocation7], 0
    // Predicated region
    $region2: #{tpu_custom_call.1} parent=1 // pred_check
      _
    $region3: #{tpu_custom_call.1} parent=1 // pred_check_branch
      %19 = sbr.rel (0) target = $region5
    $region4: #{tpu_custom_call.1} parent=1 // pred_region
      _
    $region5: #{tpu_custom_call.1} parent=1 // pred_fallthru
      _
    // Predicated region
    $region6: #{tpu_custom_call.1} parent=1 // pred_check
      _
    $region7: #{tpu_custom_call.1} parent=1 // pred_check_branch
      %21 = sbr.rel (0) target = $region9
    $region8: #{tpu_custom_call.1} parent=1 // pred_region
      _
    $region9: #{tpu_custom_call.1} parent=1 // pred_fallthru
      _
    // Predicated region
    $region10: #{tpu_custom_call.1} parent=1 // pred_check
      _
    $region11: #{tpu_custom_call.1} parent=1 // pred_check_branch
      %23 = sbr.rel (0) target = $region13
    $region12: #{tpu_custom_call.1} parent=1 // pred_region
      _
    $region13: #{tpu_custom_call.1} parent=1 // pred_fallthru
      _
    // Predicated region
    $region14: #{tpu_custom_call.1} parent=1 // pred_check
      _
    $region15: #{tpu_custom_call.1} parent=1 // pred_check_branch
      %25 = sbr.rel (0) target = $region17
    $region16: #{tpu_custom_call.1} parent=1 // pred_region
      %s27 = ssub.s32 512, 512
      %28 = vsyncadd [#allocation6], %s27
      %s29 = sshll.u32 [#allocation5], 4
      %s30 = int_to_ptr.vmem [resolvable:$true] %s29
      %35 = dma.hbm_to_vmem [thread:$0]  %s3, 512, %s30, [#allocation6], 128, 128, 8
    $region17: #{tpu_custom_call.1} parent=1 // pred_fallthru
      _
    // Predicated region
    $region18: #{tpu_custom_call.1} parent=1 // pred_check
      _
    $region19: #{tpu_custom_call.1} parent=1 // pred_check_branch
      %37 = sbr.rel (0) target = $region21
    $region20: #{tpu_custom_call.1} parent=1 // pred_region
      _
    $region21: #{tpu_custom_call.1} parent=1 // pred_fallthru
      _
    // Predicated region
    $region22: #{tpu_custom_call.1} parent=1 // pred_check
      _
    $region23: #{tpu_custom_call.1} parent=1 // pred_check_branch
      %39 = sbr.rel (0) target = $region25
    $region24: #{tpu_custom_call.1} parent=1 // pred_region
      _
    $region25: #{tpu_custom_call.1} parent=1 // pred_fallthru
      _
    // Predicated region
    $region26: #{tpu_custom_call.1} parent=1 // pred_check
      _
    $region27: #{tpu_custom_call.1} parent=1 // pred_check_branch
      %41 = sbr.rel (0) target = $region29
    $region28: #{tpu_custom_call.1} parent=1 // pred_region
      _
    $region29: #{tpu_custom_call.1} parent=1 // pred_fallthru
      _
    // Predicated region
    $region30: #{tpu_custom_call.1} parent=1 // pred_check
      _
    $region31: #{tpu_custom_call.1} parent=1 // pred_check_branch
      %43 = sbr.rel (0) target = $region33
    $region32: #{tpu_custom_call.1} parent=1 // pred_region
      _
    $region33: #{tpu_custom_call.1} parent=1 // pred_fallthru
      _
    // Predicated region
    $region34: #{tpu_custom_call.1} parent=1 // pred_check
      _
    $region35: #{tpu_custom_call.1} parent=1 // pred_check_branch
      %45 = sbr.rel (0) target = $region37
    $region36: #{tpu_custom_call.1} parent=1 // pred_region
      _
    $region37: #{tpu_custom_call.1} parent=1 // pred_fallthru
      _
    // Predicated region
    $region38: #{tpu_custom_call.1} parent=1 // pred_check
      _
    $region39: #{tpu_custom_call.1} parent=1 // pred_check_branch
      %47 = sbr.rel (0) target = $region41
    $region40: #{tpu_custom_call.1} parent=1 // pred_region
      %48 = dma.done [#allocation6], 512
    $region41: #{tpu_custom_call.1} parent=1 // pred_fallthru
      _
    %v49 = vld [vmem:[%s0] sm:$0xff]
    %v50 = vld [vmem:[%s0 + $0x8] sm:$0xff]
    %v51 = vld [vmem:[%s0 + $0x10] sm:$0xff]
    %v52 = vld [vmem:[%s0 + $0x18] sm:$0xff]
    %v53 = vld [vmem:[%s0 + $0x20] sm:$0xff]
    %v54 = vld [vmem:[%s0 + $0x28] sm:$0xff]
    %v55 = vld [vmem:[%s0 + $0x30] sm:$0xff]
    %v56 = vld [vmem:[%s0 + $0x38] sm:$0xff]
    %v57 = vld [vmem:[%s1] sm:$0xff]
    %v58 = vld [vmem:[%s2] sm:$0x1]
    %v60 = vlaneseq
    %v61 = vshrl.u32 %v60, 7
    %v62 = vsub.s32 0, %v61
    %v63 = vrot.slane %v58, %v62
    %vm65 = vcmask 64512
    %v67 = vsel %vm65, %v49, 0
    %v70 = vsel %vm65, %v50, 0
    %v73 = vsel %vm65, %v51, 0
    %v76 = vsel %vm65, %v52, 0
    %v79 = vsel %vm65, %v53, 0
    %v82 = vsel %vm65, %v54, 0
    %v85 = vsel %vm65, %v55, 0
    %v88 = vsel %vm65, %v56, 0
    %90 = vmatprep.subr.mxu0 0.0
    %91 = vmatpush1.msra.mxu0 %v57
    %92 = vmatprep.subr.mxu0 0.0
    %93 = vmatpush1.msra.mxu0 0.0
    %94 = vmatprep.subr.mxu0 0.0
    %95 = vmatpush1.msra.mxu0 0.0
    %96 = vmatprep.subr.mxu0 0.0
    %97 = vmatpush1.msra.mxu0 0.0
    %98 = vmatprep.subr.mxu0 0.0
    %99 = vmatpush1.msra.mxu0 0.0
    %100 = vmatprep.subr.mxu0 0.0
    %101 = vmatpush1.msra.mxu0 0.0
    %102 = vmatprep.subr.mxu0 0.0
    %103 = vmatpush1.msra.mxu0 0.0
    %104 = vmatprep.subr.mxu0 0.0
    %105 = vmatpush1.msra.mxu0 0.0
    %106 = vmatprep.subr.mxu0 0.0
    %107 = vmatpush1.msra.mxu0 0.0
    %108 = vmatprep.subr.mxu0 0.0
    %109 = vmatpush1.msra.mxu0 0.0
    %110 = vmatprep.subr.mxu0 0.0
    %111 = vmatpush1.msra.mxu0 0.0
    %112 = vmatprep.subr.mxu0 0.0
    %113 = vmatpush1.msra.mxu0 0.0
    %114 = vmatprep.subr.mxu0 0.0
    %115 = vmatpush1.msra.mxu0 0.0
    %116 = vmatprep.subr.mxu0 0.0
    %117 = vmatpush1.msra.mxu0 0.0
    %118 = vmatprep.subr.mxu0 0.0
    %119 = vmatpush1.msra.mxu0 0.0
    %120 = vmatprep.subr.mxu0 0.0
    %121 = vmatpush1.msra.mxu0 0.0
    %122 = vmatprep.subr.mxu0 0.0
    %123 = vmatpush1.msra.mxu0 0.0
    %124 = vmatprep.subr.mxu0 0.0
    %125 = vmatpush1.msra.mxu0 0.0
    %126 = vmatprep.subr.mxu0 0.0
    %127 = vmatpush1.msra.mxu0 0.0
    %128 = vmatprep.subr.mxu0 0.0
    %129 = vmatpush1.msra.mxu0 0.0
    %130 = vmatprep.subr.mxu0 0.0
    %131 = vmatpush1.msra.mxu0 0.0
    %132 = vmatprep.subr.mxu0 0.0
    %133 = vmatpush1.msra.mxu0 0.0
    %134 = vmatprep.subr.mxu0 0.0
    %135 = vmatpush1.msra.mxu0 0.0
    %136 = vmatprep.subr.mxu0 0.0
    %137 = vmatpush1.msra.mxu0 0.0
    %138 = vmatprep.subr.mxu0 0.0
    %139 = vmatpush1.msra.mxu0 0.0
    %140 = vmatprep.subr.mxu0 0.0
    %141 = vmatpush1.msra.mxu0 0.0
    %142 = vmatprep.subr.mxu0 0.0
    %143 = vmatpush1.msra.mxu0 0.0
    %144 = vmatprep.subr.mxu0 0.0
    %145 = vmatpush1.msra.mxu0 0.0
    %146 = vmatprep.subr.mxu0 0.0
    %147 = vmatpush1.msra.mxu0 0.0
    %148 = vmatprep.subr.mxu0 0.0
    %149 = vmatpush1.msra.mxu0 0.0
    %150 = vmatprep.subr.mxu0 0.0
    %151 = vmatpush1.msra.mxu0 0.0
    %152 = vmatprep.subr.mxu0 0.0
    %153 = vmatpush1.msra.mxu0 0.0
    %154 = vmatprep.mubr.f32.mxu0 0.0
    %155 = vmatmul.mubr.f32.gmra.mrb[0].mxu0 %v67
    %v156 = vpop.f32.mrb[0].mxu0
    %v157 = vadd.f32 %v63, %v156
    %v158 = vpop.f32.mrb[0].mxu0
    %159 = vmatprep.mubr.f32.mxu0 0.0
    %160 = vmatmul.mubr.f32.gmra.mrb[0].mxu0 %v70
    %v161 = vpop.f32.mrb[0].mxu0
    %v162 = vadd.f32 %v63, %v161
    %v163 = vpop.f32.mrb[0].mxu0
    %164 = vmatprep.mubr.f32.mxu0 0.0
    %165 = vmatmul.mubr.f32.gmra.mrb[0].mxu0 %v73
    %v166 = vpop.f32.mrb[0].mxu0
    %v167 = vadd.f32 %v63, %v166
    %v168 = vpop.f32.mrb[0].mxu0
    %169 = vmatprep.mubr.f32.mxu0 0.0
    %170 = vmatmul.mubr.f32.gmra.mrb[0].mxu0 %v76
    %v171 = vpop.f32.mrb[0].mxu0
    %v172 = vadd.f32 %v63, %v171
    %v173 = vpop.f32.mrb[0].mxu0
    %174 = vmatprep.mubr.f32.mxu0 0.0
    %175 = vmatmul.mubr.f32.gmra.mrb[0].mxu0 %v79
    %v176 = vpop.f32.mrb[0].mxu0
    %v177 = vadd.f32 %v63, %v176
    %v178 = vpop.f32.mrb[0].mxu0
    %179 = vmatprep.mubr.f32.mxu0 0.0
    %180 = vmatmul.mubr.f32.gmra.mrb[0].mxu0 %v82
    %v181 = vpop.f32.mrb[0].mxu0
    %v182 = vadd.f32 %v63, %v181
    %v183 = vpop.f32.mrb[0].mxu0
    %184 = vmatprep.mubr.f32.mxu0 0.0
    %185 = vmatmul.mubr.f32.gmra.mrb[0].mxu0 %v85
    %v186 = vpop.f32.mrb[0].mxu0
    %v187 = vadd.f32 %v63, %v186
    %v188 = vpop.f32.mrb[0].mxu0
    %189 = vmatprep.mubr.f32.mxu0 0.0
    %190 = vmatmul.mubr.f32.gmra.mrb[0].mxu0 %v88
    %v191 = vpop.f32.mrb[0].mxu0
    %v192 = vadd.f32 %v63, %v191
    %v193 = vpop.f32.mrb[0].mxu0
    %194 = vdwg.mxu0
    %vm195 = vcmask 785408
    %196 = vst.msk [vmem:[#allocation2] sm:$0xff] %vm195, %v157
    %197 = vst.msk [vmem:[#allocation2 + $0x8] sm:$0xff] %vm195, %v162
    %198 = vst.msk [vmem:[#allocation2 + $0x10] sm:$0xff] %vm195, %v167
    %199 = vst.msk [vmem:[#allocation2 + $0x18] sm:$0xff] %vm195, %v172
    %200 = vst.msk [vmem:[#allocation2 + $0x20] sm:$0xff] %vm195, %v177
    %201 = vst.msk [vmem:[#allocation2 + $0x28] sm:$0xff] %vm195, %v182
    %202 = vst.msk [vmem:[#allocation2 + $0x30] sm:$0xff] %vm195, %v187
    %203 = vst.msk [vmem:[#allocation2 + $0x38] sm:$0xff] %vm195, %v192
    %v204 = vld [vmem:[#allocation5] sm:$0xff]
    %v205 = vld [vmem:[#allocation5 + $0x8] sm:$0xff]
    %v206 = vld [vmem:[#allocation5 + $0x10] sm:$0xff]
    %v207 = vld [vmem:[#allocation5 + $0x18] sm:$0xff]
    %v208 = vld [vmem:[%s4] sm:$0x1]
    %v209 = vld [vmem:[%s5] sm:$0xff]
    %v210 = vld [vmem:[%s5 + $0x8] sm:$0xff]
    %v211 = vld [vmem:[%s5 + $0x10] sm:$0xff]
    %v212 = vld [vmem:[%s5 + $0x18] sm:$0xff]
    %v213 = vld [vmem:[%s5 + $0x20] sm:$0xff]
    %v214 = vld [vmem:[%s5 + $0x28] sm:$0xff]
    %v215 = vld [vmem:[%s5 + $0x30] sm:$0xff]
    %v216 = vld [vmem:[%s5 + $0x38] sm:$0xff]
    %v217 = vld [vmem:[%s6] sm:$0x1]
    %v218 = vld [vmem:[#allocation2] sm:$0xff]
    %vm219 = vcmask 261120
    %v221 = vsel %vm219, 0.0, 0
    %223 = vmatprep.subr.mxu0 0.0
    %224 = vmatpush1.msra.mxu0 %v204
    %225 = vmatprep.subr.mxu0 0.0
    %226 = vmatpush1.msra.mxu0 %v205
    %227 = vmatprep.subr.mxu0 0.0
    %228 = vmatpush1.msra.mxu0 %v206
    %229 = vmatprep.subr.mxu0 0.0
    %230 = vmatpush1.msra.mxu0 %v207
    %231 = vmatprep.subr.mxu0 0.0
    %232 = vmatpush1.msra.mxu0 0.0
    %233 = vmatprep.subr.mxu0 0.0
    %234 = vmatpush1.msra.mxu0 0.0
    %235 = vmatprep.subr.mxu0 0.0
    %236 = vmatpush1.msra.mxu0 0.0
    %237 = vmatprep.subr.mxu0 0.0
    %238 = vmatpush1.msra.mxu0 0.0
    %239 = vmatprep.subr.mxu0 0.0
    %240 = vmatpush1.msra.mxu0 0.0
    %241 = vmatprep.subr.mxu0 0.0
    %242 = vmatpush1.msra.mxu0 0.0
    %243 = vmatprep.subr.mxu0 0.0
    %244 = vmatpush1.msra.mxu0 0.0
    %245 = vmatprep.subr.mxu0 0.0
    %246 = vmatpush1.msra.mxu0 0.0
    %247 = vmatprep.subr.mxu0 0.0
    %248 = vmatpush1.msra.mxu0 0.0
    %249 = vmatprep.subr.mxu0 0.0
    %250 = vmatpush1.msra.mxu0 0.0
    %251 = vmatprep.subr.mxu0 0.0
    %252 = vmatpush1.msra.mxu0 0.0
    %253 = vmatprep.subr.mxu0 0.0
    %254 = vmatpush1.msra.mxu0 0.0
    %255 = vmatprep.subr.mxu0 0.0
    %256 = vmatpush1.msra.mxu0 0.0
    %257 = vmatprep.subr.mxu0 0.0
    %258 = vmatpush1.msra.mxu0 0.0
    %259 = vmatprep.subr.mxu0 0.0
    %260 = vmatpush1.msra.mxu0 0.0
    %261 = vmatprep.subr.mxu0 0.0
    %262 = vmatpush1.msra.mxu0 0.0
    %263 = vmatprep.subr.mxu0 0.0
    %264 = vmatpush1.msra.mxu0 0.0
    %265 = vmatprep.subr.mxu0 0.0
    %266 = vmatpush1.msra.mxu0 0.0
    %267 = vmatprep.subr.mxu0 0.0
    %268 = vmatpush1.msra.mxu0 0.0
    %269 = vmatprep.subr.mxu0 0.0
    %270 = vmatpush1.msra.mxu0 0.0
    %271 = vmatprep.subr.mxu0 0.0
    %272 = vmatpush1.msra.mxu0 0.0
    %273 = vmatprep.subr.mxu0 0.0
    %274 = vmatpush1.msra.mxu0 0.0
    %275 = vmatprep.subr.mxu0 0.0
    %276 = vmatpush1.msra.mxu0 0.0
    %277 = vmatprep.subr.mxu0 0.0
    %278 = vmatpush1.msra.mxu0 0.0
    %279 = vmatprep.subr.mxu0 0.0
    %280 = vmatpush1.msra.mxu0 0.0
    %281 = vmatprep.subr.mxu0 0.0
    %282 = vmatpush1.msra.mxu0 0.0
    %283 = vmatprep.subr.mxu0 0.0
    %284 = vmatpush1.msra.mxu0 0.0
    %285 = vmatprep.subr.mxu0 0.0
    %286 = vmatpush1.msra.mxu0 0.0
    %287 = vmatprep.mubr.f32.mxu0 0.0
    %288 = vmatmul.mubr.f32.gmra.mrb[0].mxu0 %v221
    %v289 = vpop.f32.mrb[0].mxu0
    %v290 = vadd.f32 0.0, %v289
    %v291 = vpop.f32.mrb[0].mxu0
    %292 = vdwg.mxu0
    %v293 = vadd.f32 %v218, %v290
    %v294 = vxor.u32 %v293, 2147483648
    %v295 = vmul.f32 %v294, 1.442695
    %v296 = vpow.pop %v295
    %v297 = vadd.f32 %v296, 1.0
    %v298 = vrcp.pop %v297
    %v299 = vmul.f32 1.0, %v298
    %v301 = vlaneseq
    %v302 = vshrl.u32 %v301, 7
    %v303 = vsub.s32 0, %v302
    %v304 = vrot.slane %v208, %v303
    %305 = vrot.lane.b32.xlu0 %v304, 64
    %v306 = vpop.permute.xlu0 %305
    %v308 = vadd.f32 %v290, %v306
    %310 = vrot.lane.b32.xlu0 %v308, 64
    %v311 = vpop.permute.xlu0 %310
    %v313 = vmul.f32 %v299, %v311
    %315 = vrot.lane.b32.xlu0 %v313, 64
    %v316 = vpop.permute.xlu0 %315
    %v318 = vadd.f32 %v218, %v316
    %v319 = vtanh.pop %v318
    %v320 = vsub.f32 1.0, %v299
    %322 = vrot.lane.b32.xlu0 %v319, 96
    %v323 = vpop.permute.xlu0 %322
    %v325 = vmul.f32 %v320, %v323
    %v326 = vmul.f32 %v299, 0.0
    %v327 = vadd.f32 %v325, %v326
    %329 = vrot.lane.b32.xlu0 %v327, 96
    %v330 = vpop.permute.xlu0 %329
    %v332 = vsel %vm219, %v330, 0.0
    %v334 = vlaneseq
    %v335 = vshrl.u32 %v334, 7
    %v336 = vsub.s32 0, %v335
    %v337 = vrot.slane %v217, %v336
    %vm339 = vcmask 523264
    %v341 = vsel %vm339, %v332, 0
    %343 = vmatprep.subr.mxu0 0.0
    %344 = vmatpush1.msra.mxu0 %v209
    %345 = vmatprep.subr.mxu0 0.0
    %346 = vmatpush1.msra.mxu0 %v210
    %347 = vmatprep.subr.mxu0 0.0
    %348 = vmatpush1.msra.mxu0 %v211
    %349 = vmatprep.subr.mxu0 0.0
    %350 = vmatpush1.msra.mxu0 %v212
    %351 = vmatprep.subr.mxu0 0.0
    %352 = vmatpush1.msra.mxu0 %v213
    %353 = vmatprep.subr.mxu0 0.0
    %354 = vmatpush1.msra.mxu0 %v214
    %355 = vmatprep.subr.mxu0 0.0
    %356 = vmatpush1.msra.mxu0 %v215
    %357 = vmatprep.subr.mxu0 0.0
    %358 = vmatpush1.msra.mxu0 %v216
    %359 = vmatprep.subr.mxu0 0.0
    %360 = vmatpush1.msra.mxu0 0.0
    %361 = vmatprep.subr.mxu0 0.0
    %362 = vmatpush1.msra.mxu0 0.0
    %363 = vmatprep.subr.mxu0 0.0
    %364 = vmatpush1.msra.mxu0 0.0
    %365 = vmatprep.subr.mxu0 0.0
    %366 = vmatpush1.msra.mxu0 0.0
    %367 = vmatprep.subr.mxu0 0.0
    %368 = vmatpush1.msra.mxu0 0.0
    %369 = vmatprep.subr.mxu0 0.0
    %370 = vmatpush1.msra.mxu0 0.0
    %371 = vmatprep.subr.mxu0 0.0
    %372 = vmatpush1.msra.mxu0 0.0
    %373 = vmatprep.subr.mxu0 0.0
    %374 = vmatpush1.msra.mxu0 0.0
    %375 = vmatprep.subr.mxu0 0.0
    %376 = vmatpush1.msra.mxu0 0.0
    %377 = vmatprep.subr.mxu0 0.0
    %378 = vmatpush1.msra.mxu0 0.0
    %379 = vmatprep.subr.mxu0 0.0
    %380 = vmatpush1.msra.mxu0 0.0
    %381 = vmatprep.subr.mxu0 0.0
    %382 = vmatpush1.msra.mxu0 0.0
    %383 = vmatprep.subr.mxu0 0.0
    %384 = vmatpush1.msra.mxu0 0.0
    %385 = vmatprep.subr.mxu0 0.0
    %386 = vmatpush1.msra.mxu0 0.0
    %387 = vmatprep.subr.mxu0 0.0
    %388 = vmatpush1.msra.mxu0 0.0
    %389 = vmatprep.subr.mxu0 0.0
    %390 = vmatpush1.msra.mxu0 0.0
    %391 = vmatprep.subr.mxu0 0.0
    %392 = vmatpush1.msra.mxu0 0.0
    %393 = vmatprep.subr.mxu0 0.0
    %394 = vmatpush1.msra.mxu0 0.0
    %395 = vmatprep.subr.mxu0 0.0
    %396 = vmatpush1.msra.mxu0 0.0
    %397 = vmatprep.subr.mxu0 0.0
    %398 = vmatpush1.msra.mxu0 0.0
    %399 = vmatprep.subr.mxu0 0.0
    %400 = vmatpush1.msra.mxu0 0.0
    %401 = vmatprep.subr.mxu0 0.0
    %402 = vmatpush1.msra.mxu0 0.0
    %403 = vmatprep.subr.mxu0 0.0
    %404 = vmatpush1.msra.mxu0 0.0
    %405 = vmatprep.subr.mxu0 0.0
    %406 = vmatpush1.msra.mxu0 0.0
    %407 = vmatprep.mubr.f32.mxu0 0.0
    %408 = vmatmul.mubr.f32.gmra.mrb[0].mxu0 %v341
    %v409 = vpop.f32.mrb[0].mxu0
    %v410 = vadd.f32 %v337, %v409
    %v411 = vpop.f32.mrb[0].mxu0
    %412 = vdwg.mxu0
    %v413 = vxor.u32 %v410, 2147483648
    %v414 = vmul.f32 %v413, 1.442695
    %v415 = vpow.pop %v414
    %v416 = vadd.f32 %v415, 1.0
    %v417 = vrcp.pop %v416
    %v418 = vmul.f32 1.0, %v417
    %420 = vrot.lane.b32.xlu0 %v410, 32
    %v421 = vpop.permute.xlu0 %420
    %v423 = vmul.f32 %v418, %v421
    %425 = vrot.lane.b32.xlu0 %v423, 64
    %v426 = vpop.permute.xlu0 %425
    %v428 = vadd.f32 %v410, %v426
    %v429 = vtanh.pop %v428
    %v430 = vsub.f32 1.0, %v418
    %432 = vrot.lane.b32.xlu0 %v429, 96
    %v433 = vpop.permute.xlu0 %432
    %v435 = vmul.f32 %v430, %v433
    %v436 = vmul.f32 %v418, 0.0
    %v437 = vadd.f32 %v435, %v436
    %439 = vrot.lane.b32.xlu0 %v437, 96
    %v440 = vpop.permute.xlu0 %439
    %442 = vst.msk [vmem:[#allocation3] sm:$0xff] %vm219, %v440
    %s443 = scalar_lea.vmem [#allocation2], 8
    %v444 = vld [vmem:[%s443] sm:$0xff]
    %v445 = vsel %vm219, %v330, 0
    %447 = vmatprep.subr.mxu0 0.0
    %448 = vmatpush1.msra.mxu0 %v204
    %449 = vmatprep.subr.mxu0 0.0
    %450 = vmatpush1.msra.mxu0 %v205
    %451 = vmatprep.subr.mxu0 0.0
    %452 = vmatpush1.msra.mxu0 %v206
    %453 = vmatprep.subr.mxu0 0.0
    %454 = vmatpush1.msra.mxu0 %v207
    %455 = vmatprep.subr.mxu0 0.0
    %456 = vmatpush1.msra.mxu0 0.0
    %457 = vmatprep.subr.mxu0 0.0
    %458 = vmatpush1.msra.mxu0 0.0
    %459 = vmatprep.subr.mxu0 0.0
    %460 = vmatpush1.msra.mxu0 0.0
    %461 = vmatprep.subr.mxu0 0.0
    %462 = vmatpush1.msra.mxu0 0.0
    %463 = vmatprep.subr.mxu0 0.0
    %464 = vmatpush1.msra.mxu0 0.0
    %465 = vmatprep.subr.mxu0 0.0
    %466 = vmatpush1.msra.mxu0 0.0
    %467 = vmatprep.subr.mxu0 0.0
    %468 = vmatpush1.msra.mxu0 0.0
    %469 = vmatprep.subr.mxu0 0.0
    %470 = vmatpush1.msra.mxu0 0.0
    %471 = vmatprep.subr.mxu0 0.0
    %472 = vmatpush1.msra.mxu0 0.0
    %473 = vmatprep.subr.mxu0 0.0
    %474 = vmatpush1.msra.mxu0 0.0
    %475 = vmatprep.subr.mxu0 0.0
    %476 = vmatpush1.msra.mxu0 0.0
    %477 = vmatprep.subr.mxu0 0.0
    %478 = vmatpush1.msra.mxu0 0.0
    %479 = vmatprep.subr.mxu0 0.0
    %480 = vmatpush1.msra.mxu0 0.0
    %481 = vmatprep.subr.mxu0 0.0
    %482 = vmatpush1.msra.mxu0 0.0
    %483 = vmatprep.subr.mxu0 0.0
    %484 = vmatpush1.msra.mxu0 0.0
    %485 = vmatprep.subr.mxu0 0.0
    %486 = vmatpush1.msra.mxu0 0.0
    %487 = vmatprep.subr.mxu0 0.0
    %488 = vmatpush1.msra.mxu0 0.0
    %489 = vmatprep.subr.mxu0 0.0
    %490 = vmatpush1.msra.mxu0 0.0
    %491 = vmatprep.subr.mxu0 0.0
    %492 = vmatpush1.msra.mxu0 0.0
    %493 = vmatprep.subr.mxu0 0.0
    %494 = vmatpush1.msra.mxu0 0.0
    %495 = vmatprep.subr.mxu0 0.0
    %496 = vmatpush1.msra.mxu0 0.0
    %497 = vmatprep.subr.mxu0 0.0
    %498 = vmatpush1.msra.mxu0 0.0
    %499 = vmatprep.subr.mxu0 0.0
    %500 = vmatpush1.msra.mxu0 0.0
    %501 = vmatprep.subr.mxu0 0.0
    %502 = vmatpush1.msra.mxu0 0.0
    %503 = vmatprep.subr.mxu0 0.0
    %504 = vmatpush1.msra.mxu0 0.0
    %505 = vmatprep.subr.mxu0 0.0
    %506 = vmatpush1.msra.mxu0 0.0
    %507 = vmatprep.subr.mxu0 0.0
    %508 = vmatpush1.msra.mxu0 0.0
    %509 = vmatprep.subr.mxu0 0.0
    %510 = vmatpush1.msra.mxu0 0.0
    %511 = vmatprep.mubr.f32.mxu0 0.0
    %512 = vmatmul.mubr.f32.gmra.mrb[0].mxu0 %v445
    %v513 = vpop.f32.mrb[0].mxu0
    %v514 = vadd.f32 0.0, %v513
    %v515 = vpop.f32.mrb[0].mxu0
    %516 = vdwg.mxu0
    %v517 = vadd.f32 %v444, %v514
    %v518 = vxor.u32 %v517, 2147483648
    %v519 = vmul.f32 %v518, 1.442695
    %v520 = vpow.pop %v519
    %v521 = vadd.f32 %v520, 1.0
    %v522 = vrcp.pop %v521
    %v523 = vmul.f32 1.0, %v522
    %v524 = vadd.f32 %v514, %v306
    %526 = vrot.lane.b32.xlu0 %v524, 64
    %v527 = vpop.permute.xlu0 %526
    %v529 = vmul.f32 %v523, %v527
    %531 = vrot.lane.b32.xlu0 %v529, 64
    %v532 = vpop.permute.xlu0 %531
    %v534 = vadd.f32 %v444, %v532
    %v535 = vtanh.pop %v534
    %v536 = vsub.f32 1.0, %v523
    %538 = vrot.lane.b32.xlu0 %v535, 96
    %v539 = vpop.permute.xlu0 %538
    %v541 = vmul.f32 %v536, %v539
    %v542 = vmul.f32 %v523, %v327
    %v543 = vadd.f32 %v541, %v542
    %545 = vrot.lane.b32.xlu0 %v543, 96
    %v546 = vpop.permute.xlu0 %545
    %v548 = vsel %vm219, %v546, %v437
    %v550 = vsel %vm339, %v548, 0
    %552 = vmatprep.subr.mxu0 0.0
    %553 = vmatpush1.msra.mxu0 %v209
    %554 = vmatprep.subr.mxu0 0.0
    %555 = vmatpush1.msra.mxu0 %v210
    %556 = vmatprep.subr.mxu0 0.0
    %557 = vmatpush1.msra.mxu0 %v211
    %558 = vmatprep.subr.mxu0 0.0
    %559 = vmatpush1.msra.mxu0 %v212
    %560 = vmatprep.subr.mxu0 0.0
    %561 = vmatpush1.msra.mxu0 %v213
    %562 = vmatprep.subr.mxu0 0.0
    %563 = vmatpush1.msra.mxu0 %v214
    %564 = vmatprep.subr.mxu0 0.0
    %565 = vmatpush1.msra.mxu0 %v215
    %566 = vmatprep.subr.mxu0 0.0
    %567 = vmatpush1.msra.mxu0 %v216
    %568 = vmatprep.subr.mxu0 0.0
    %569 = vmatpush1.msra.mxu0 0.0
    %570 = vmatprep.subr.mxu0 0.0
    %571 = vmatpush1.msra.mxu0 0.0
    %572 = vmatprep.subr.mxu0 0.0
    %573 = vmatpush1.msra.mxu0 0.0
    %574 = vmatprep.subr.mxu0 0.0
    %575 = vmatpush1.msra.mxu0 0.0
    %576 = vmatprep.subr.mxu0 0.0
    %577 = vmatpush1.msra.mxu0 0.0
    %578 = vmatprep.subr.mxu0 0.0
    %579 = vmatpush1.msra.mxu0 0.0
    %580 = vmatprep.subr.mxu0 0.0
    %581 = vmatpush1.msra.mxu0 0.0
    %582 = vmatprep.subr.mxu0 0.0
    %583 = vmatpush1.msra.mxu0 0.0
    %584 = vmatprep.subr.mxu0 0.0
    %585 = vmatpush1.msra.mxu0 0.0
    %586 = vmatprep.subr.mxu0 0.0
    %587 = vmatpush1.msra.mxu0 0.0
    %588 = vmatprep.subr.mxu0 0.0
    %589 = vmatpush1.msra.mxu0 0.0
    %590 = vmatprep.subr.mxu0 0.0
    %591 = vmatpush1.msra.mxu0 0.0
    %592 = vmatprep.subr.mxu0 0.0
    %593 = vmatpush1.msra.mxu0 0.0
    %594 = vmatprep.subr.mxu0 0.0
    %595 = vmatpush1.msra.mxu0 0.0
    %596 = vmatprep.subr.mxu0 0.0
    %597 = vmatpush1.msra.mxu0 0.0
    %598 = vmatprep.subr.mxu0 0.0
    %599 = vmatpush1.msra.mxu0 0.0
    %600 = vmatprep.subr.mxu0 0.0
    %601 = vmatpush1.msra.mxu0 0.0
    %602 = vmatprep.subr.mxu0 0.0
    %603 = vmatpush1.msra.mxu0 0.0
    %604 = vmatprep.subr.mxu0 0.0
    %605 = vmatpush1.msra.mxu0 0.0
    %606 = vmatprep.subr.mxu0 0.0
    %607 = vmatpush1.msra.mxu0 0.0
    %608 = vmatprep.subr.mxu0 0.0
    %609 = vmatpush1.msra.mxu0 0.0
    %610 = vmatprep.subr.mxu0 0.0
    %611 = vmatpush1.msra.mxu0 0.0
    %612 = vmatprep.subr.mxu0 0.0
    %613 = vmatpush1.msra.mxu0 0.0
    %614 = vmatprep.subr.mxu0 0.0
    %615 = vmatpush1.msra.mxu0 0.0
    %616 = vmatprep.mubr.f32.mxu0 0.0
    %617 = vmatmul.mubr.f32.gmra.mrb[0].mxu0 %v550
    %v618 = vpop.f32.mrb[0].mxu0
    %v619 = vadd.f32 %v337, %v618
    %v620 = vpop.f32.mrb[0].mxu0
    %621 = vdwg.mxu0
    %v622 = vxor.u32 %v619, 2147483648
    %v623 = vmul.f32 %v622, 1.442695
    %v624 = vpow.pop %v623
    %v625 = vadd.f32 %v624, 1.0
    %v626 = vrcp.pop %v625
    %v627 = vmul.f32 1.0, %v626
    %629 = vrot.lane.b32.xlu0 %v619, 32
    %v630 = vpop.permute.xlu0 %629
    %v632 = vmul.f32 %v627, %v630
    %634 = vrot.lane.b32.xlu0 %v632, 64
    %v635 = vpop.permute.xlu0 %634
    %v637 = vadd.f32 %v619, %v635
    %v638 = vtanh.pop %v637
    %v639 = vsub.f32 1.0, %v627
    %641 = vrot.lane.b32.xlu0 %v638, 96
    %v642 = vpop.permute.xlu0 %641
    %v644 = vmul.f32 %v639, %v642
    %v645 = vmul.f32 %v627, %v437
    %v646 = vadd.f32 %v644, %v645
    %648 = vrot.lane.b32.xlu0 %v646, 96
    %v649 = vpop.permute.xlu0 %648
    %s651 = scalar_lea.vmem [#allocation3], 8
    %652 = vst.msk [vmem:[%s651] sm:$0xff] %vm219, %v649
    %s653 = scalar_lea.vmem [#allocation2], 16
    %v654 = vld [vmem:[%s653] sm:$0xff]
    %v655 = vsel %vm219, %v546, 0
    %657 = vmatprep.subr.mxu0 0.0
    %658 = vmatpush1.msra.mxu0 %v204
    %659 = vmatprep.subr.mxu0 0.0
    %660 = vmatpush1.msra.mxu0 %v205
    %661 = vmatprep.subr.mxu0 0.0
    %662 = vmatpush1.msra.mxu0 %v206
    %663 = vmatprep.subr.mxu0 0.0
    %664 = vmatpush1.msra.mxu0 %v207
    %665 = vmatprep.subr.mxu0 0.0
    %666 = vmatpush1.msra.mxu0 0.0
    %667 = vmatprep.subr.mxu0 0.0
    %668 = vmatpush1.msra.mxu0 0.0
    %669 = vmatprep.subr.mxu0 0.0
    %670 = vmatpush1.msra.mxu0 0.0
    %671 = vmatprep.subr.mxu0 0.0
    %672 = vmatpush1.msra.mxu0 0.0
    %673 = vmatprep.subr.mxu0 0.0
    %674 = vmatpush1.msra.mxu0 0.0
    %675 = vmatprep.subr.mxu0 0.0
    %676 = vmatpush1.msra.mxu0 0.0
    %677 = vmatprep.subr.mxu0 0.0
    %678 = vmatpush1.msra.mxu0 0.0
    %679 = vmatprep.subr.mxu0 0.0
    %680 = vmatpush1.msra.mxu0 0.0
    %681 = vmatprep.subr.mxu0 0.0
    %682 = vmatpush1.msra.mxu0 0.0
    %683 = vmatprep.subr.mxu0 0.0
    %684 = vmatpush1.msra.mxu0 0.0
    %685 = vmatprep.subr.mxu0 0.0
    %686 = vmatpush1.msra.mxu0 0.0
    %687 = vmatprep.subr.mxu0 0.0
    %688 = vmatpush1.msra.mxu0 0.0
    %689 = vmatprep.subr.mxu0 0.0
    %690 = vmatpush1.msra.mxu0 0.0
    %691 = vmatprep.subr.mxu0 0.0
    %692 = vmatpush1.msra.mxu0 0.0
    %693 = vmatprep.subr.mxu0 0.0
    %694 = vmatpush1.msra.mxu0 0.0
    %695 = vmatprep.subr.mxu0 0.0
    %696 = vmatpush1.msra.mxu0 0.0
    %697 = vmatprep.subr.mxu0 0.0
    %698 = vmatpush1.msra.mxu0 0.0
    %699 = vmatprep.subr.mxu0 0.0
    %700 = vmatpush1.msra.mxu0 0.0
    %701 = vmatprep.subr.mxu0 0.0
    %702 = vmatpush1.msra.mxu0 0.0
    %703 = vmatprep.subr.mxu0 0.0
    %704 = vmatpush1.msra.mxu0 0.0
    %705 = vmatprep.subr.mxu0 0.0
    %706 = vmatpush1.msra.mxu0 0.0
    %707 = vmatprep.subr.mxu0 0.0
    %708 = vmatpush1.msra.mxu0 0.0
    %709 = vmatprep.subr.mxu0 0.0
    %710 = vmatpush1.msra.mxu0 0.0
    %711 = vmatprep.subr.mxu0 0.0
    %712 = vmatpush1.msra.mxu0 0.0
    %713 = vmatprep.subr.mxu0 0.0
    %714 = vmatpush1.msra.mxu0 0.0
    %715 = vmatprep.subr.mxu0 0.0
    %716 = vmatpush1.msra.mxu0 0.0
    %717 = vmatprep.subr.mxu0 0.0
    %718 = vmatpush1.msra.mxu0 0.0
    %719 = vmatprep.subr.mxu0 0.0
    %720 = vmatpush1.msra.mxu0 0.0
    %721 = vmatprep.mubr.f32.mxu0 0.0
    %722 = vmatmul.mubr.f32.gmra.mrb[0].mxu0 %v655
    %v723 = vpop.f32.mrb[0].mxu0
    %v724 = vadd.f32 0.0, %v723
    %v725 = vpop.f32.mrb[0].mxu0
    %726 = vdwg.mxu0
    %v727 = vadd.f32 %v654, %v724
    %v728 = vxor.u32 %v727, 2147483648
    %v729 = vmul.f32 %v728, 1.442695
    %v730 = vpow.pop %v729
    %v731 = vadd.f32 %v730, 1.0
    %v732 = vrcp.pop %v731
    %v733 = vmul.f32 1.0, %v732
    %v734 = vadd.f32 %v724, %v306
    %736 = vrot.lane.b32.xlu0 %v734, 64
    %v737 = vpop.permute.xlu0 %736
    %v739 = vmul.f32 %v733, %v737
    %741 = vrot.lane.b32.xlu0 %v739, 64
    %v742 = vpop.permute.xlu0 %741
    %v744 = vadd.f32 %v654, %v742
    %v745 = vtanh.pop %v744
    %v746 = vsub.f32 1.0, %v733
    %748 = vrot.lane.b32.xlu0 %v745, 96
    %v749 = vpop.permute.xlu0 %748
    %v751 = vmul.f32 %v746, %v749
    %v752 = vmul.f32 %v733, %v543
    %v753 = vadd.f32 %v751, %v752
    %755 = vrot.lane.b32.xlu0 %v753, 96
    %v756 = vpop.permute.xlu0 %755
    %v758 = vsel %vm219, %v756, %v646
    %v760 = vsel %vm339, %v758, 0
    %762 = vmatprep.subr.mxu0 0.0
    %763 = vmatpush1.msra.mxu0 %v209
    %764 = vmatprep.subr.mxu0 0.0
    %765 = vmatpush1.msra.mxu0 %v210
    %766 = vmatprep.subr.mxu0 0.0
    %767 = vmatpush1.msra.mxu0 %v211
    %768 = vmatprep.subr.mxu0 0.0
    %769 = vmatpush1.msra.mxu0 %v212
    %770 = vmatprep.subr.mxu0 0.0
    %771 = vmatpush1.msra.mxu0 %v213
    %772 = vmatprep.subr.mxu0 0.0
    %773 = vmatpush1.msra.mxu0 %v214
    %774 = vmatprep.subr.mxu0 0.0
    %775 = vmatpush1.msra.mxu0 %v215
    %776 = vmatprep.subr.mxu0 0.0
    %777 = vmatpush1.msra.mxu0 %v216
    %778 = vmatprep.subr.mxu0 0.0
    %779 = vmatpush1.msra.mxu0 0.0
    %780 = vmatprep.subr.mxu0 0.0
    %781 = vmatpush1.msra.mxu0 0.0
    %782 = vmatprep.subr.mxu0 0.0
    %783 = vmatpush1.msra.mxu0 0.0
    %784 = vmatprep.subr.mxu0 0.0
    %785 = vmatpush1.msra.mxu0 0.0
    %786 = vmatprep.subr.mxu0 0.0
    %787 = vmatpush1.msra.mxu0 0.0
    %788 = vmatprep.subr.mxu0 0.0
    %789 = vmatpush1.msra.mxu0 0.0
    %790 = vmatprep.subr.mxu0 0.0
    %791 = vmatpush1.msra.mxu0 0.0
    %792 = vmatprep.subr.mxu0 0.0
    %793 = vmatpush1.msra.mxu0 0.0
    %794 = vmatprep.subr.mxu0 0.0
    %795 = vmatpush1.msra.mxu0 0.0
    %796 = vmatprep.subr.mxu0 0.0
    %797 = vmatpush1.msra.mxu0 0.0
    %798 = vmatprep.subr.mxu0 0.0
    %799 = vmatpush1.msra.mxu0 0.0
    %800 = vmatprep.subr.mxu0 0.0
    %801 = vmatpush1.msra.mxu0 0.0
    %802 = vmatprep.subr.mxu0 0.0
    %803 = vmatpush1.msra.mxu0 0.0
    %804 = vmatprep.subr.mxu0 0.0
    %805 = vmatpush1.msra.mxu0 0.0
    %806 = vmatprep.subr.mxu0 0.0
    %807 = vmatpush1.msra.mxu0 0.0
    %808 = vmatprep.subr.mxu0 0.0
    %809 = vmatpush1.msra.mxu0 0.0
    %810 = vmatprep.subr.mxu0 0.0
    %811 = vmatpush1.msra.mxu0 0.0
    %812 = vmatprep.subr.mxu0 0.0
    %813 = vmatpush1.msra.mxu0 0.0
    %814 = vmatprep.subr.mxu0 0.0
    %815 = vmatpush1.msra.mxu0 0.0
    %816 = vmatprep.subr.mxu0 0.0
    %817 = vmatpush1.msra.mxu0 0.0
    %818 = vmatprep.subr.mxu0 0.0
    %819 = vmatpush1.msra.mxu0 0.0
    %820 = vmatprep.subr.mxu0 0.0
    %821 = vmatpush1.msra.mxu0 0.0
    %822 = vmatprep.subr.mxu0 0.0
    %823 = vmatpush1.msra.mxu0 0.0
    %824 = vmatprep.subr.mxu0 0.0
    %825 = vmatpush1.msra.mxu0 0.0
    %826 = vmatprep.mubr.f32.mxu0 0.0
    %827 = vmatmul.mubr.f32.gmra.mrb[0].mxu0 %v760
    %v828 = vpop.f32.mrb[0].mxu0
    %v829 = vadd.f32 %v337, %v828
    %v830 = vpop.f32.mrb[0].mxu0
    %831 = vdwg.mxu0
    %v832 = vxor.u32 %v829, 2147483648
    %v833 = vmul.f32 %v832, 1.442695
    %v834 = vpow.pop %v833
    %v835 = vadd.f32 %v834, 1.0
    %v836 = vrcp.pop %v835
    %v837 = vmul.f32 1.0, %v836
    %839 = vrot.lane.b32.xlu0 %v829, 32
    %v840 = vpop.permute.xlu0 %839
    %v842 = vmul.f32 %v837, %v840
    %844 = vrot.lane.b32.xlu0 %v842, 64
    %v845 = vpop.permute.xlu0 %844
    %v847 = vadd.f32 %v829, %v845
    %v848 = vtanh.pop %v847
    %v849 = vsub.f32 1.0, %v837
    %851 = vrot.lane.b32.xlu0 %v848, 96
    %v852 = vpop.permute.xlu0 %851
    %v854 = vmul.f32 %v849, %v852
    %v855 = vmul.f32 %v837, %v646
    %v856 = vadd.f32 %v854, %v855
    %858 = vrot.lane.b32.xlu0 %v856, 96
    %v859 = vpop.permute.xlu0 %858
    %s861 = scalar_lea.vmem [#allocation3], 16
    %862 = vst.msk [vmem:[%s861] sm:$0xff] %vm219, %v859
    %s863 = scalar_lea.vmem [#allocation2], 24
    %v864 = vld [vmem:[%s863] sm:$0xff]
    %v865 = vsel %vm219, %v756, 0
    %867 = vmatprep.subr.mxu0 0.0
    %868 = vmatpush1.msra.mxu0 %v204
    %869 = vmatprep.subr.mxu0 0.0
    %870 = vmatpush1.msra.mxu0 %v205
    %871 = vmatprep.subr.mxu0 0.0
    %872 = vmatpush1.msra.mxu0 %v206
    %873 = vmatprep.subr.mxu0 0.0
    %874 = vmatpush1.msra.mxu0 %v207
    %875 = vmatprep.subr.mxu0 0.0
    %876 = vmatpush1.msra.mxu0 0.0
    %877 = vmatprep.subr.mxu0 0.0
    %878 = vmatpush1.msra.mxu0 0.0
    %879 = vmatprep.subr.mxu0 0.0
    %880 = vmatpush1.msra.mxu0 0.0
    %881 = vmatprep.subr.mxu0 0.0
    %882 = vmatpush1.msra.mxu0 0.0
    %883 = vmatprep.subr.mxu0 0.0
    %884 = vmatpush1.msra.mxu0 0.0
    %885 = vmatprep.subr.mxu0 0.0
    %886 = vmatpush1.msra.mxu0 0.0
    %887 = vmatprep.subr.mxu0 0.0
    %888 = vmatpush1.msra.mxu0 0.0
    %889 = vmatprep.subr.mxu0 0.0
    %890 = vmatpush1.msra.mxu0 0.0
    %891 = vmatprep.subr.mxu0 0.0
    %892 = vmatpush1.msra.mxu0 0.0
    %893 = vmatprep.subr.mxu0 0.0
    %894 = vmatpush1.msra.mxu0 0.0
    %895 = vmatprep.subr.mxu0 0.0
    %896 = vmatpush1.msra.mxu0 0.0
    %897 = vmatprep.subr.mxu0 0.0
    %898 = vmatpush1.msra.mxu0 0.0
    %899 = vmatprep.subr.mxu0 0.0
    %900 = vmatpush1.msra.mxu0 0.0
    %901 = vmatprep.subr.mxu0 0.0
    %902 = vmatpush1.msra.mxu0 0.0
    %903 = vmatprep.subr.mxu0 0.0
    %904 = vmatpush1.msra.mxu0 0.0
    %905 = vmatprep.subr.mxu0 0.0
    %906 = vmatpush1.msra.mxu0 0.0
    %907 = vmatprep.subr.mxu0 0.0
    %908 = vmatpush1.msra.mxu0 0.0
    %909 = vmatprep.subr.mxu0 0.0
    %910 = vmatpush1.msra.mxu0 0.0
    %911 = vmatprep.subr.mxu0 0.0
    %912 = vmatpush1.msra.mxu0 0.0
    %913 = vmatprep.subr.mxu0 0.0
    %914 = vmatpush1.msra.mxu0 0.0
    %915 = vmatprep.subr.mxu0 0.0
    %916 = vmatpush1.msra.mxu0 0.0
    %917 = vmatprep.subr.mxu0 0.0
    %918 = vmatpush1.msra.mxu0 0.0
    %919 = vmatprep.subr.mxu0 0.0
    %920 = vmatpush1.msra.mxu0 0.0
    %921 = vmatprep.subr.mxu0 0.0
    %922 = vmatpush1.msra.mxu0 0.0
    %923 = vmatprep.subr.mxu0 0.0
    %924 = vmatpush1.msra.mxu0 0.0
    %925 = vmatprep.subr.mxu0 0.0
    %926 = vmatpush1.msra.mxu0 0.0
    %927 = vmatprep.subr.mxu0 0.0
    %928 = vmatpush1.msra.mxu0 0.0
    %929 = vmatprep.subr.mxu0 0.0
    %930 = vmatpush1.msra.mxu0 0.0
    %931 = vmatprep.mubr.f32.mxu0 0.0
    %932 = vmatmul.mubr.f32.gmra.mrb[0].mxu0 %v865
    %v933 = vpop.f32.mrb[0].mxu0
    %v934 = vadd.f32 0.0, %v933
    %v935 = vpop.f32.mrb[0].mxu0
    %936 = vdwg.mxu0
    %v937 = vadd.f32 %v864, %v934
    %v938 = vxor.u32 %v937, 2147483648
    %v939 = vmul.f32 %v938, 1.442695
    %v940 = vpow.pop %v939
    %v941 = vadd.f32 %v940, 1.0
    %v942 = vrcp.pop %v941
    %v943 = vmul.f32 1.0, %v942
    %v944 = vadd.f32 %v934, %v306
    %946 = vrot.lane.b32.xlu0 %v944, 64
    %v947 = vpop.permute.xlu0 %946
    %v949 = vmul.f32 %v943, %v947
    %951 = vrot.lane.b32.xlu0 %v949, 64
    %v952 = vpop.permute.xlu0 %951
    %v954 = vadd.f32 %v864, %v952
    %v955 = vtanh.pop %v954
    %v956 = vsub.f32 1.0, %v943
    %958 = vrot.lane.b32.xlu0 %v955, 96
    %v959 = vpop.permute.xlu0 %958
    %v961 = vmul.f32 %v956, %v959
    %v962 = vmul.f32 %v943, %v753
    %v963 = vadd.f32 %v961, %v962
    %965 = vrot.lane.b32.xlu0 %v963, 96
    %v966 = vpop.permute.xlu0 %965
    %v968 = vsel %vm219, %v966, %v856
    %v970 = vsel %vm339, %v968, 0
    %972 = vmatprep.subr.mxu0 0.0
    %973 = vmatpush1.msra.mxu0 %v209
    %974 = vmatprep.subr.mxu0 0.0
    %975 = vmatpush1.msra.mxu0 %v210
    %976 = vmatprep.subr.mxu0 0.0
    %977 = vmatpush1.msra.mxu0 %v211
    %978 = vmatprep.subr.mxu0 0.0
    %979 = vmatpush1.msra.mxu0 %v212
    %980 = vmatprep.subr.mxu0 0.0
    %981 = vmatpush1.msra.mxu0 %v213
    %982 = vmatprep.subr.mxu0 0.0
    %983 = vmatpush1.msra.mxu0 %v214
    %984 = vmatprep.subr.mxu0 0.0
    %985 = vmatpush1.msra.mxu0 %v215
    %986 = vmatprep.subr.mxu0 0.0
    %987 = vmatpush1.msra.mxu0 %v216
    %988 = vmatprep.subr.mxu0 0.0
    %989 = vmatpush1.msra.mxu0 0.0
    %990 = vmatprep.subr.mxu0 0.0
    %991 = vmatpush1.msra.mxu0 0.0
    %992 = vmatprep.subr.mxu0 0.0
    %993 = vmatpush1.msra.mxu0 0.0
    %994 = vmatprep.subr.mxu0 0.0
    %995 = vmatpush1.msra.mxu0 0.0
    %996 = vmatprep.subr.mxu0 0.0
    %997 = vmatpush1.msra.mxu0 0.0
    %998 = vmatprep.subr.mxu0 0.0
    %999 = vmatpush1.msra.mxu0 0.0
    %1000 = vmatprep.subr.mxu0 0.0
    %1001 = vmatpush1.msra.mxu0 0.0
    %1002 = vmatprep.subr.mxu0 0.0
    %1003 = vmatpush1.msra.mxu0 0.0
    %1004 = vmatprep.subr.mxu0 0.0
    %1005 = vmatpush1.msra.mxu0 0.0
    %1006 = vmatprep.subr.mxu0 0.0
    %1007 = vmatpush1.msra.mxu0 0.0
    %1008 = vmatprep.subr.mxu0 0.0
    %1009 = vmatpush1.msra.mxu0 0.0
    %1010 = vmatprep.subr.mxu0 0.0
    %1011 = vmatpush1.msra.mxu0 0.0
    %1012 = vmatprep.subr.mxu0 0.0
    %1013 = vmatpush1.msra.mxu0 0.0
    %1014 = vmatprep.subr.mxu0 0.0
    %1015 = vmatpush1.msra.mxu0 0.0
    %1016 = vmatprep.subr.mxu0 0.0
    %1017 = vmatpush1.msra.mxu0 0.0
    %1018 = vmatprep.subr.mxu0 0.0
    %1019 = vmatpush1.msra.mxu0 0.0
    %1020 = vmatprep.subr.mxu0 0.0
    %1021 = vmatpush1.msra.mxu0 0.0
    %1022 = vmatprep.subr.mxu0 0.0
    %1023 = vmatpush1.msra.mxu0 0.0
    %1024 = vmatprep.subr.mxu0 0.0
    %1025 = vmatpush1.msra.mxu0 0.0
    %1026 = vmatprep.subr.mxu0 0.0
    %1027 = vmatpush1.msra.mxu0 0.0
    %1028 = vmatprep.subr.mxu0 0.0
    %1029 = vmatpush1.msra.mxu0 0.0
    %1030 = vmatprep.subr.mxu0 0.0
    %1031 = vmatpush1.msra.mxu0 0.0
    %1032 = vmatprep.subr.mxu0 0.0
    %1033 = vmatpush1.msra.mxu0 0.0
    %1034 = vmatprep.subr.mxu0 0.0
    %1035 = vmatpush1.msra.mxu0 0.0
    %1036 = vmatprep.mubr.f32.mxu0 0.0
    %1037 = vmatmul.mubr.f32.gmra.mrb[0].mxu0 %v970
    %v1038 = vpop.f32.mrb[0].mxu0
    %v1039 = vadd.f32 %v337, %v1038
    %v1040 = vpop.f32.mrb[0].mxu0
    %1041 = vdwg.mxu0
    %v1042 = vxor.u32 %v1039, 2147483648
    %v1043 = vmul.f32 %v1042, 1.442695
    %v1044 = vpow.pop %v1043
    %v1045 = vadd.f32 %v1044, 1.0
    %v1046 = vrcp.pop %v1045
    %v1047 = vmul.f32 1.0, %v1046
    %1049 = vrot.lane.b32.xlu0 %v1039, 32
    %v1050 = vpop.permute.xlu0 %1049
    %v1052 = vmul.f32 %v1047, %v1050
    %1054 = vrot.lane.b32.xlu0 %v1052, 64
    %v1055 = vpop.permute.xlu0 %1054
    %v1057 = vadd.f32 %v1039, %v1055
    %v1058 = vtanh.pop %v1057
    %v1059 = vsub.f32 1.0, %v1047
    %1061 = vrot.lane.b32.xlu0 %v1058, 96
    %v1062 = vpop.permute.xlu0 %1061
    %v1064 = vmul.f32 %v1059, %v1062
    %v1065 = vmul.f32 %v1047, %v856
    %v1066 = vadd.f32 %v1064, %v1065
    %1068 = vrot.lane.b32.xlu0 %v1066, 96
    %v1069 = vpop.permute.xlu0 %1068
    %s1071 = scalar_lea.vmem [#allocation3], 24
    %1072 = vst.msk [vmem:[%s1071] sm:$0xff] %vm219, %v1069
    %s1073 = scalar_lea.vmem [#allocation2], 32
    %v1074 = vld [vmem:[%s1073] sm:$0xff]
    %v1075 = vsel %vm219, %v966, 0
    %1077 = vmatprep.subr.mxu0 0.0
    %1078 = vmatpush1.msra.mxu0 %v204
    %1079 = vmatprep.subr.mxu0 0.0
    %1080 = vmatpush1.msra.mxu0 %v205
    %1081 = vmatprep.subr.mxu0 0.0
    %1082 = vmatpush1.msra.mxu0 %v206
    %1083 = vmatprep.subr.mxu0 0.0
    %1084 = vmatpush1.msra.mxu0 %v207
    %1085 = vmatprep.subr.mxu0 0.0
    %1086 = vmatpush1.msra.mxu0 0.0
    %1087 = vmatprep.subr.mxu0 0.0
    %1088 = vmatpush1.msra.mxu0 0.0
    %1089 = vmatprep.subr.mxu0 0.0
    %1090 = vmatpush1.msra.mxu0 0.0
    %1091 = vmatprep.subr.mxu0 0.0
    %1092 = vmatpush1.msra.mxu0 0.0
    %1093 = vmatprep.subr.mxu0 0.0
    %1094 = vmatpush1.msra.mxu0 0.0
    %1095 = vmatprep.subr.mxu0 0.0
    %1096 = vmatpush1.msra.mxu0 0.0
    %1097 = vmatprep.subr.mxu0 0.0
    %1098 = vmatpush1.msra.mxu0 0.0
    %1099 = vmatprep.subr.mxu0 0.0
    %1100 = vmatpush1.msra.mxu0 0.0
    %1101 = vmatprep.subr.mxu0 0.0
    %1102 = vmatpush1.msra.mxu0 0.0
    %1103 = vmatprep.subr.mxu0 0.0
    %1104 = vmatpush1.msra.mxu0 0.0
    %1105 = vmatprep.subr.mxu0 0.0
    %1106 = vmatpush1.msra.mxu0 0.0
    %1107 = vmatprep.subr.mxu0 0.0
    %1108 = vmatpush1.msra.mxu0 0.0
    %1109 = vmatprep.subr.mxu0 0.0
    %1110 = vmatpush1.msra.mxu0 0.0
    %1111 = vmatprep.subr.mxu0 0.0
    %1112 = vmatpush1.msra.mxu0 0.0
    %1113 = vmatprep.subr.mxu0 0.0
    %1114 = vmatpush1.msra.mxu0 0.0
    %1115 = vmatprep.subr.mxu0 0.0
    %1116 = vmatpush1.msra.mxu0 0.0
    %1117 = vmatprep.subr.mxu0 0.0
    %1118 = vmatpush1.msra.mxu0 0.0
    %1119 = vmatprep.subr.mxu0 0.0
    %1120 = vmatpush1.msra.mxu0 0.0
    %1121 = vmatprep.subr.mxu0 0.0
    %1122 = vmatpush1.msra.mxu0 0.0
    %1123 = vmatprep.subr.mxu0 0.0
    %1124 = vmatpush1.msra.mxu0 0.0
    %1125 = vmatprep.subr.mxu0 0.0
    %1126 = vmatpush1.msra.mxu0 0.0
    %1127 = vmatprep.subr.mxu0 0.0
    %1128 = vmatpush1.msra.mxu0 0.0
    %1129 = vmatprep.subr.mxu0 0.0
    %1130 = vmatpush1.msra.mxu0 0.0
    %1131 = vmatprep.subr.mxu0 0.0
    %1132 = vmatpush1.msra.mxu0 0.0
    %1133 = vmatprep.subr.mxu0 0.0
    %1134 = vmatpush1.msra.mxu0 0.0
    %1135 = vmatprep.subr.mxu0 0.0
    %1136 = vmatpush1.msra.mxu0 0.0
    %1137 = vmatprep.subr.mxu0 0.0
    %1138 = vmatpush1.msra.mxu0 0.0
    %1139 = vmatprep.subr.mxu0 0.0
    %1140 = vmatpush1.msra.mxu0 0.0
    %1141 = vmatprep.mubr.f32.mxu0 0.0
    %1142 = vmatmul.mubr.f32.gmra.mrb[0].mxu0 %v1075
    %v1143 = vpop.f32.mrb[0].mxu0
    %v1144 = vadd.f32 0.0, %v1143
    %v1145 = vpop.f32.mrb[0].mxu0
    %1146 = vdwg.mxu0
    %v1147 = vadd.f32 %v1074, %v1144
    %v1148 = vxor.u32 %v1147, 2147483648
    %v1149 = vmul.f32 %v1148, 1.442695
    %v1150 = vpow.pop %v1149
    %v1151 = vadd.f32 %v1150, 1.0
    %v1152 = vrcp.pop %v1151
    %v1153 = vmul.f32 1.0, %v1152
    %v1154 = vadd.f32 %v1144, %v306
    %1156 = vrot.lane.b32.xlu0 %v1154, 64
    %v1157 = vpop.permute.xlu0 %1156
    %v1159 = vmul.f32 %v1153, %v1157
    %1161 = vrot.lane.b32.xlu0 %v1159, 64
    %v1162 = vpop.permute.xlu0 %1161
    %v1164 = vadd.f32 %v1074, %v1162
    %v1165 = vtanh.pop %v1164
    %v1166 = vsub.f32 1.0, %v1153
    %1168 = vrot.lane.b32.xlu0 %v1165, 96
    %v1169 = vpop.permute.xlu0 %1168
    %v1171 = vmul.f32 %v1166, %v1169
    %v1172 = vmul.f32 %v1153, %v963
    %v1173 = vadd.f32 %v1171, %v1172
    %1175 = vrot.lane.b32.xlu0 %v1173, 96
    %v1176 = vpop.permute.xlu0 %1175
    %v1178 = vsel %vm219, %v1176, %v1066
    %v1180 = vsel %vm339, %v1178, 0
    %1182 = vmatprep.subr.mxu0 0.0
    %1183 = vmatpush1.msra.mxu0 %v209
    %1184 = vmatprep.subr.mxu0 0.0
    %1185 = vmatpush1.msra.mxu0 %v210
    %1186 = vmatprep.subr.mxu0 0.0
    %1187 = vmatpush1.msra.mxu0 %v211
    %1188 = vmatprep.subr.mxu0 0.0
    %1189 = vmatpush1.msra.mxu0 %v212
    %1190 = vmatprep.subr.mxu0 0.0
    %1191 = vmatpush1.msra.mxu0 %v213
    %1192 = vmatprep.subr.mxu0 0.0
    %1193 = vmatpush1.msra.mxu0 %v214
    %1194 = vmatprep.subr.mxu0 0.0
    %1195 = vmatpush1.msra.mxu0 %v215
    %1196 = vmatprep.subr.mxu0 0.0
    %1197 = vmatpush1.msra.mxu0 %v216
    %1198 = vmatprep.subr.mxu0 0.0
    %1199 = vmatpush1.msra.mxu0 0.0
    %1200 = vmatprep.subr.mxu0 0.0
    %1201 = vmatpush1.msra.mxu0 0.0
    %1202 = vmatprep.subr.mxu0 0.0
    %1203 = vmatpush1.msra.mxu0 0.0
    %1204 = vmatprep.subr.mxu0 0.0
    %1205 = vmatpush1.msra.mxu0 0.0
    %1206 = vmatprep.subr.mxu0 0.0
    %1207 = vmatpush1.msra.mxu0 0.0
    %1208 = vmatprep.subr.mxu0 0.0
    %1209 = vmatpush1.msra.mxu0 0.0
    %1210 = vmatprep.subr.mxu0 0.0
    %1211 = vmatpush1.msra.mxu0 0.0
    %1212 = vmatprep.subr.mxu0 0.0
    %1213 = vmatpush1.msra.mxu0 0.0
    %1214 = vmatprep.subr.mxu0 0.0
    %1215 = vmatpush1.msra.mxu0 0.0
    %1216 = vmatprep.subr.mxu0 0.0
    %1217 = vmatpush1.msra.mxu0 0.0
    %1218 = vmatprep.subr.mxu0 0.0
    %1219 = vmatpush1.msra.mxu0 0.0
    %1220 = vmatprep.subr.mxu0 0.0
    %1221 = vmatpush1.msra.mxu0 0.0
    %1222 = vmatprep.subr.mxu0 0.0
    %1223 = vmatpush1.msra.mxu0 0.0
    %1224 = vmatprep.subr.mxu0 0.0
    %1225 = vmatpush1.msra.mxu0 0.0
    %1226 = vmatprep.subr.mxu0 0.0
    %1227 = vmatpush1.msra.mxu0 0.0
    %1228 = vmatprep.subr.mxu0 0.0
    %1229 = vmatpush1.msra.mxu0 0.0
    %1230 = vmatprep.subr.mxu0 0.0
    %1231 = vmatpush1.msra.mxu0 0.0
    %1232 = vmatprep.subr.mxu0 0.0
    %1233 = vmatpush1.msra.mxu0 0.0
    %1234 = vmatprep.subr.mxu0 0.0
    %1235 = vmatpush1.msra.mxu0 0.0
    %1236 = vmatprep.subr.mxu0 0.0
    %1237 = vmatpush1.msra.mxu0 0.0
    %1238 = vmatprep.subr.mxu0 0.0
    %1239 = vmatpush1.msra.mxu0 0.0
    %1240 = vmatprep.subr.mxu0 0.0
    %1241 = vmatpush1.msra.mxu0 0.0
    %1242 = vmatprep.subr.mxu0 0.0
    %1243 = vmatpush1.msra.mxu0 0.0
    %1244 = vmatprep.subr.mxu0 0.0
    %1245 = vmatpush1.msra.mxu0 0.0
    %1246 = vmatprep.mubr.f32.mxu0 0.0
    %1247 = vmatmul.mubr.f32.gmra.mrb[0].mxu0 %v1180
    %v1248 = vpop.f32.mrb[0].mxu0
    %v1249 = vadd.f32 %v337, %v1248
    %v1250 = vpop.f32.mrb[0].mxu0
    %1251 = vdwg.mxu0
    %v1252 = vxor.u32 %v1249, 2147483648
    %v1253 = vmul.f32 %v1252, 1.442695
    %v1254 = vpow.pop %v1253
    %v1255 = vadd.f32 %v1254, 1.0
    %v1256 = vrcp.pop %v1255
    %v1257 = vmul.f32 1.0, %v1256
    %1259 = vrot.lane.b32.xlu0 %v1249, 32
    %v1260 = vpop.permute.xlu0 %1259
    %v1262 = vmul.f32 %v1257, %v1260
    %1264 = vrot.lane.b32.xlu0 %v1262, 64
    %v1265 = vpop.permute.xlu0 %1264
    %v1267 = vadd.f32 %v1249, %v1265
    %v1268 = vtanh.pop %v1267
    %v1269 = vsub.f32 1.0, %v1257
    %1271 = vrot.lane.b32.xlu0 %v1268, 96
    %v1272 = vpop.permute.xlu0 %1271
    %v1274 = vmul.f32 %v1269, %v1272
    %v1275 = vmul.f32 %v1257, %v1066
    %v1276 = vadd.f32 %v1274, %v1275
    %1278 = vrot.lane.b32.xlu0 %v1276, 96
    %v1279 = vpop.permute.xlu0 %1278
    %s1281 = scalar_lea.vmem [#allocation3], 32
    %1282 = vst.msk [vmem:[%s1281] sm:$0xff] %vm219, %v1279
    %s1283 = scalar_lea.vmem [#allocation2], 40
    %v1284 = vld [vmem:[%s1283] sm:$0xff]
    %v1285 = vsel %vm219, %v1176, 0
    %1287 = vmatprep.subr.mxu0 0.0
    %1288 = vmatpush1.msra.mxu0 %v204
    %1289 = vmatprep.subr.mxu0 0.0
    %1290 = vmatpush1.msra.mxu0 %v205
    %1291 = vmatprep.subr.mxu0 0.0
    %1292 = vmatpush1.msra.mxu0 %v206
    %1293 = vmatprep.subr.mxu0 0.0
    %1294 = vmatpush1.msra.mxu0 %v207
    %1295 = vmatprep.subr.mxu0 0.0
    %1296 = vmatpush1.msra.mxu0 0.0
    %1297 = vmatprep.subr.mxu0 0.0
    %1298 = vmatpush1.msra.mxu0 0.0
    %1299 = vmatprep.subr.mxu0 0.0
    %1300 = vmatpush1.msra.mxu0 0.0
    %1301 = vmatprep.subr.mxu0 0.0
    %1302 = vmatpush1.msra.mxu0 0.0
    %1303 = vmatprep.subr.mxu0 0.0
    %1304 = vmatpush1.msra.mxu0 0.0
    %1305 = vmatprep.subr.mxu0 0.0
    %1306 = vmatpush1.msra.mxu0 0.0
    %1307 = vmatprep.subr.mxu0 0.0
    %1308 = vmatpush1.msra.mxu0 0.0
    %1309 = vmatprep.subr.mxu0 0.0
    %1310 = vmatpush1.msra.mxu0 0.0
    %1311 = vmatprep.subr.mxu0 0.0
    %1312 = vmatpush1.msra.mxu0 0.0
    %1313 = vmatprep.subr.mxu0 0.0
    %1314 = vmatpush1.msra.mxu0 0.0
    %1315 = vmatprep.subr.mxu0 0.0
    %1316 = vmatpush1.msra.mxu0 0.0
    %1317 = vmatprep.subr.mxu0 0.0
    %1318 = vmatpush1.msra.mxu0 0.0
    %1319 = vmatprep.subr.mxu0 0.0
    %1320 = vmatpush1.msra.mxu0 0.0
    %1321 = vmatprep.subr.mxu0 0.0
    %1322 = vmatpush1.msra.mxu0 0.0
    %1323 = vmatprep.subr.mxu0 0.0
    %1324 = vmatpush1.msra.mxu0 0.0
    %1325 = vmatprep.subr.mxu0 0.0
    %1326 = vmatpush1.msra.mxu0 0.0
    %1327 = vmatprep.subr.mxu0 0.0
    %1328 = vmatpush1.msra.mxu0 0.0
    %1329 = vmatprep.subr.mxu0 0.0
    %1330 = vmatpush1.msra.mxu0 0.0
    %1331 = vmatprep.subr.mxu0 0.0
    %1332 = vmatpush1.msra.mxu0 0.0
    %1333 = vmatprep.subr.mxu0 0.0
    %1334 = vmatpush1.msra.mxu0 0.0
    %1335 = vmatprep.subr.mxu0 0.0
    %1336 = vmatpush1.msra.mxu0 0.0
    %1337 = vmatprep.subr.mxu0 0.0
    %1338 = vmatpush1.msra.mxu0 0.0
    %1339 = vmatprep.subr.mxu0 0.0
    %1340 = vmatpush1.msra.mxu0 0.0
    %1341 = vmatprep.subr.mxu0 0.0
    %1342 = vmatpush1.msra.mxu0 0.0
    %1343 = vmatprep.subr.mxu0 0.0
    %1344 = vmatpush1.msra.mxu0 0.0
    %1345 = vmatprep.subr.mxu0 0.0
    %1346 = vmatpush1.msra.mxu0 0.0
    %1347 = vmatprep.subr.mxu0 0.0
    %1348 = vmatpush1.msra.mxu0 0.0
    %1349 = vmatprep.subr.mxu0 0.0
    %1350 = vmatpush1.msra.mxu0 0.0
    %1351 = vmatprep.mubr.f32.mxu0 0.0
    %1352 = vmatmul.mubr.f32.gmra.mrb[0].mxu0 %v1285
    %v1353 = vpop.f32.mrb[0].mxu0
    %v1354 = vadd.f32 0.0, %v1353
    %v1355 = vpop.f32.mrb[0].mxu0
    %1356 = vdwg.mxu0
    %v1357 = vadd.f32 %v1284, %v1354
    %v1358 = vxor.u32 %v1357, 2147483648
    %v1359 = vmul.f32 %v1358, 1.442695
    %v1360 = vpow.pop %v1359
    %v1361 = vadd.f32 %v1360, 1.0
    %v1362 = vrcp.pop %v1361
    %v1363 = vmul.f32 1.0, %v1362
    %v1364 = vadd.f32 %v1354, %v306
    %1366 = vrot.lane.b32.xlu0 %v1364, 64
    %v1367 = vpop.permute.xlu0 %1366
    %v1369 = vmul.f32 %v1363, %v1367
    %1371 = vrot.lane.b32.xlu0 %v1369, 64
    %v1372 = vpop.permute.xlu0 %1371
    %v1374 = vadd.f32 %v1284, %v1372
    %v1375 = vtanh.pop %v1374
    %v1376 = vsub.f32 1.0, %v1363
    %1378 = vrot.lane.b32.xlu0 %v1375, 96
    %v1379 = vpop.permute.xlu0 %1378
    %v1381 = vmul.f32 %v1376, %v1379
    %v1382 = vmul.f32 %v1363, %v1173
    %v1383 = vadd.f32 %v1381, %v1382
    %1385 = vrot.lane.b32.xlu0 %v1383, 96
    %v1386 = vpop.permute.xlu0 %1385
    %v1388 = vsel %vm219, %v1386, %v1276
    %v1390 = vsel %vm339, %v1388, 0
    %1392 = vmatprep.subr.mxu0 0.0
    %1393 = vmatpush1.msra.mxu0 %v209
    %1394 = vmatprep.subr.mxu0 0.0
    %1395 = vmatpush1.msra.mxu0 %v210
    %1396 = vmatprep.subr.mxu0 0.0
    %1397 = vmatpush1.msra.mxu0 %v211
    %1398 = vmatprep.subr.mxu0 0.0
    %1399 = vmatpush1.msra.mxu0 %v212
    %1400 = vmatprep.subr.mxu0 0.0
    %1401 = vmatpush1.msra.mxu0 %v213
    %1402 = vmatprep.subr.mxu0 0.0
    %1403 = vmatpush1.msra.mxu0 %v214
    %1404 = vmatprep.subr.mxu0 0.0
    %1405 = vmatpush1.msra.mxu0 %v215
    %1406 = vmatprep.subr.mxu0 0.0
    %1407 = vmatpush1.msra.mxu0 %v216
    %1408 = vmatprep.subr.mxu0 0.0
    %1409 = vmatpush1.msra.mxu0 0.0
    %1410 = vmatprep.subr.mxu0 0.0
    %1411 = vmatpush1.msra.mxu0 0.0
    %1412 = vmatprep.subr.mxu0 0.0
    %1413 = vmatpush1.msra.mxu0 0.0
    %1414 = vmatprep.subr.mxu0 0.0
    %1415 = vmatpush1.msra.mxu0 0.0
    %1416 = vmatprep.subr.mxu0 0.0
    %1417 = vmatpush1.msra.mxu0 0.0
    %1418 = vmatprep.subr.mxu0 0.0
    %1419 = vmatpush1.msra.mxu0 0.0
    %1420 = vmatprep.subr.mxu0 0.0
    %1421 = vmatpush1.msra.mxu0 0.0
    %1422 = vmatprep.subr.mxu0 0.0
    %1423 = vmatpush1.msra.mxu0 0.0
    %1424 = vmatprep.subr.mxu0 0.0
    %1425 = vmatpush1.msra.mxu0 0.0
    %1426 = vmatprep.subr.mxu0 0.0
    %1427 = vmatpush1.msra.mxu0 0.0
    %1428 = vmatprep.subr.mxu0 0.0
    %1429 = vmatpush1.msra.mxu0 0.0
    %1430 = vmatprep.subr.mxu0 0.0
    %1431 = vmatpush1.msra.mxu0 0.0
    %1432 = vmatprep.subr.mxu0 0.0
    %1433 = vmatpush1.msra.mxu0 0.0
    %1434 = vmatprep.subr.mxu0 0.0
    %1435 = vmatpush1.msra.mxu0 0.0
    %1436 = vmatprep.subr.mxu0 0.0
    %1437 = vmatpush1.msra.mxu0 0.0
    %1438 = vmatprep.subr.mxu0 0.0
    %1439 = vmatpush1.msra.mxu0 0.0
    %1440 = vmatprep.subr.mxu0 0.0
    %1441 = vmatpush1.msra.mxu0 0.0
    %1442 = vmatprep.subr.mxu0 0.0
    %1443 = vmatpush1.msra.mxu0 0.0
    %1444 = vmatprep.subr.mxu0 0.0
    %1445 = vmatpush1.msra.mxu0 0.0
    %1446 = vmatprep.subr.mxu0 0.0
    %1447 = vmatpush1.msra.mxu0 0.0
    %1448 = vmatprep.subr.mxu0 0.0
    %1449 = vmatpush1.msra.mxu0 0.0
    %1450 = vmatprep.subr.mxu0 0.0
    %1451 = vmatpush1.msra.mxu0 0.0
    %1452 = vmatprep.subr.mxu0 0.0
    %1453 = vmatpush1.msra.mxu0 0.0
    %1454 = vmatprep.subr.mxu0 0.0
    %1455 = vmatpush1.msra.mxu0 0.0
    %1456 = vmatprep.mubr.f32.mxu0 0.0
    %1457 = vmatmul.mubr.f32.gmra.mrb[0].mxu0 %v1390
    %v1458 = vpop.f32.mrb[0].mxu0
    %v1459 = vadd.f32 %v337, %v1458
    %v1460 = vpop.f32.mrb[0].mxu0
    %1461 = vdwg.mxu0
    %v1462 = vxor.u32 %v1459, 2147483648
    %v1463 = vmul.f32 %v1462, 1.442695
    %v1464 = vpow.pop %v1463
    %v1465 = vadd.f32 %v1464, 1.0
    %v1466 = vrcp.pop %v1465
    %v1467 = vmul.f32 1.0, %v1466
    %1469 = vrot.lane.b32.xlu0 %v1459, 32
    %v1470 = vpop.permute.xlu0 %1469
    %v1472 = vmul.f32 %v1467, %v1470
    %1474 = vrot.lane.b32.xlu0 %v1472, 64
    %v1475 = vpop.permute.xlu0 %1474
    %v1477 = vadd.f32 %v1459, %v1475
    %v1478 = vtanh.pop %v1477
    %v1479 = vsub.f32 1.0, %v1467
    %1481 = vrot.lane.b32.xlu0 %v1478, 96
    %v1482 = vpop.permute.xlu0 %1481
    %v1484 = vmul.f32 %v1479, %v1482
    %v1485 = vmul.f32 %v1467, %v1276
    %v1486 = vadd.f32 %v1484, %v1485
    %1488 = vrot.lane.b32.xlu0 %v1486, 96
    %v1489 = vpop.permute.xlu0 %1488
    %s1491 = scalar_lea.vmem [#allocation3], 40
    %1492 = vst.msk [vmem:[%s1491] sm:$0xff] %vm219, %v1489
    %s1493 = scalar_lea.vmem [#allocation2], 48
    %v1494 = vld [vmem:[%s1493] sm:$0xff]
    %v1495 = vsel %vm219, %v1386, 0
    %1497 = vmatprep.subr.mxu0 0.0
    %1498 = vmatpush1.msra.mxu0 %v204
    %1499 = vmatprep.subr.mxu0 0.0
    %1500 = vmatpush1.msra.mxu0 %v205
    %1501 = vmatprep.subr.mxu0 0.0
    %1502 = vmatpush1.msra.mxu0 %v206
    %1503 = vmatprep.subr.mxu0 0.0
    %1504 = vmatpush1.msra.mxu0 %v207
    %1505 = vmatprep.subr.mxu0 0.0
    %1506 = vmatpush1.msra.mxu0 0.0
    %1507 = vmatprep.subr.mxu0 0.0
    %1508 = vmatpush1.msra.mxu0 0.0
    %1509 = vmatprep.subr.mxu0 0.0
    %1510 = vmatpush1.msra.mxu0 0.0
    %1511 = vmatprep.subr.mxu0 0.0
    %1512 = vmatpush1.msra.mxu0 0.0
    %1513 = vmatprep.subr.mxu0 0.0
    %1514 = vmatpush1.msra.mxu0 0.0
    %1515 = vmatprep.subr.mxu0 0.0
    %1516 = vmatpush1.msra.mxu0 0.0
    %1517 = vmatprep.subr.mxu0 0.0
    %1518 = vmatpush1.msra.mxu0 0.0
    %1519 = vmatprep.subr.mxu0 0.0
    %1520 = vmatpush1.msra.mxu0 0.0
    %1521 = vmatprep.subr.mxu0 0.0
    %1522 = vmatpush1.msra.mxu0 0.0
    %1523 = vmatprep.subr.mxu0 0.0
    %1524 = vmatpush1.msra.mxu0 0.0
    %1525 = vmatprep.subr.mxu0 0.0
    %1526 = vmatpush1.msra.mxu0 0.0
    %1527 = vmatprep.subr.mxu0 0.0
    %1528 = vmatpush1.msra.mxu0 0.0
    %1529 = vmatprep.subr.mxu0 0.0
    %1530 = vmatpush1.msra.mxu0 0.0
    %1531 = vmatprep.subr.mxu0 0.0
    %1532 = vmatpush1.msra.mxu0 0.0
    %1533 = vmatprep.subr.mxu0 0.0
    %1534 = vmatpush1.msra.mxu0 0.0
    %1535 = vmatprep.subr.mxu0 0.0
    %1536 = vmatpush1.msra.mxu0 0.0
    %1537 = vmatprep.subr.mxu0 0.0
    %1538 = vmatpush1.msra.mxu0 0.0
    %1539 = vmatprep.subr.mxu0 0.0
    %1540 = vmatpush1.msra.mxu0 0.0
    %1541 = vmatprep.subr.mxu0 0.0
    %1542 = vmatpush1.msra.mxu0 0.0
    %1543 = vmatprep.subr.mxu0 0.0
    %1544 = vmatpush1.msra.mxu0 0.0
    %1545 = vmatprep.subr.mxu0 0.0
    %1546 = vmatpush1.msra.mxu0 0.0
    %1547 = vmatprep.subr.mxu0 0.0
    %1548 = vmatpush1.msra.mxu0 0.0
    %1549 = vmatprep.subr.mxu0 0.0
    %1550 = vmatpush1.msra.mxu0 0.0
    %1551 = vmatprep.subr.mxu0 0.0
    %1552 = vmatpush1.msra.mxu0 0.0
    %1553 = vmatprep.subr.mxu0 0.0
    %1554 = vmatpush1.msra.mxu0 0.0
    %1555 = vmatprep.subr.mxu0 0.0
    %1556 = vmatpush1.msra.mxu0 0.0
    %1557 = vmatprep.subr.mxu0 0.0
    %1558 = vmatpush1.msra.mxu0 0.0
    %1559 = vmatprep.subr.mxu0 0.0
    %1560 = vmatpush1.msra.mxu0 0.0
    %1561 = vmatprep.mubr.f32.mxu0 0.0
    %1562 = vmatmul.mubr.f32.gmra.mrb[0].mxu0 %v1495
    %v1563 = vpop.f32.mrb[0].mxu0
    %v1564 = vadd.f32 0.0, %v1563
    %v1565 = vpop.f32.mrb[0].mxu0
    %1566 = vdwg.mxu0
    %v1567 = vadd.f32 %v1494, %v1564
    %v1568 = vxor.u32 %v1567, 2147483648
    %v1569 = vmul.f32 %v1568, 1.442695
    %v1570 = vpow.pop %v1569
    %v1571 = vadd.f32 %v1570, 1.0
    %v1572 = vrcp.pop %v1571
    %v1573 = vmul.f32 1.0, %v1572
    %v1574 = vadd.f32 %v1564, %v306
    %1576 = vrot.lane.b32.xlu0 %v1574, 64
    %v1577 = vpop.permute.xlu0 %1576
    %v1579 = vmul.f32 %v1573, %v1577
    %1581 = vrot.lane.b32.xlu0 %v1579, 64
    %v1582 = vpop.permute.xlu0 %1581
    %v1584 = vadd.f32 %v1494, %v1582
    %v1585 = vtanh.pop %v1584
    %v1586 = vsub.f32 1.0, %v1573
    %1588 = vrot.lane.b32.xlu0 %v1585, 96
    %v1589 = vpop.permute.xlu0 %1588
    %v1591 = vmul.f32 %v1586, %v1589
    %v1592 = vmul.f32 %v1573, %v1383
    %v1593 = vadd.f32 %v1591, %v1592
    %1595 = vrot.lane.b32.xlu0 %v1593, 96
    %v1596 = vpop.permute.xlu0 %1595
    %v1598 = vsel %vm219, %v1596, %v1486
    %v1600 = vsel %vm339, %v1598, 0
    %1602 = vmatprep.subr.mxu0 0.0
    %1603 = vmatpush1.msra.mxu0 %v209
    %1604 = vmatprep.subr.mxu0 0.0
    %1605 = vmatpush1.msra.mxu0 %v210
    %1606 = vmatprep.subr.mxu0 0.0
    %1607 = vmatpush1.msra.mxu0 %v211
    %1608 = vmatprep.subr.mxu0 0.0
    %1609 = vmatpush1.msra.mxu0 %v212
    %1610 = vmatprep.subr.mxu0 0.0
    %1611 = vmatpush1.msra.mxu0 %v213
    %1612 = vmatprep.subr.mxu0 0.0
    %1613 = vmatpush1.msra.mxu0 %v214
    %1614 = vmatprep.subr.mxu0 0.0
    %1615 = vmatpush1.msra.mxu0 %v215
    %1616 = vmatprep.subr.mxu0 0.0
    %1617 = vmatpush1.msra.mxu0 %v216
    %1618 = vmatprep.subr.mxu0 0.0
    %1619 = vmatpush1.msra.mxu0 0.0
    %1620 = vmatprep.subr.mxu0 0.0
    %1621 = vmatpush1.msra.mxu0 0.0
    %1622 = vmatprep.subr.mxu0 0.0
    %1623 = vmatpush1.msra.mxu0 0.0
    %1624 = vmatprep.subr.mxu0 0.0
    %1625 = vmatpush1.msra.mxu0 0.0
    %1626 = vmatprep.subr.mxu0 0.0
    %1627 = vmatpush1.msra.mxu0 0.0
    %1628 = vmatprep.subr.mxu0 0.0
    %1629 = vmatpush1.msra.mxu0 0.0
    %1630 = vmatprep.subr.mxu0 0.0
    %1631 = vmatpush1.msra.mxu0 0.0
    %1632 = vmatprep.subr.mxu0 0.0
    %1633 = vmatpush1.msra.mxu0 0.0
    %1634 = vmatprep.subr.mxu0 0.0
    %1635 = vmatpush1.msra.mxu0 0.0
    %1636 = vmatprep.subr.mxu0 0.0
    %1637 = vmatpush1.msra.mxu0 0.0
    %1638 = vmatprep.subr.mxu0 0.0
    %1639 = vmatpush1.msra.mxu0 0.0
    %1640 = vmatprep.subr.mxu0 0.0
    %1641 = vmatpush1.msra.mxu0 0.0
    %1642 = vmatprep.subr.mxu0 0.0
    %1643 = vmatpush1.msra.mxu0 0.0
    %1644 = vmatprep.subr.mxu0 0.0
    %1645 = vmatpush1.msra.mxu0 0.0
    %1646 = vmatprep.subr.mxu0 0.0
    %1647 = vmatpush1.msra.mxu0 0.0
    %1648 = vmatprep.subr.mxu0 0.0
    %1649 = vmatpush1.msra.mxu0 0.0
    %1650 = vmatprep.subr.mxu0 0.0
    %1651 = vmatpush1.msra.mxu0 0.0
    %1652 = vmatprep.subr.mxu0 0.0
    %1653 = vmatpush1.msra.mxu0 0.0
    %1654 = vmatprep.subr.mxu0 0.0
    %1655 = vmatpush1.msra.mxu0 0.0
    %1656 = vmatprep.subr.mxu0 0.0
    %1657 = vmatpush1.msra.mxu0 0.0
    %1658 = vmatprep.subr.mxu0 0.0
    %1659 = vmatpush1.msra.mxu0 0.0
    %1660 = vmatprep.subr.mxu0 0.0
    %1661 = vmatpush1.msra.mxu0 0.0
    %1662 = vmatprep.subr.mxu0 0.0
    %1663 = vmatpush1.msra.mxu0 0.0
    %1664 = vmatprep.subr.mxu0 0.0
    %1665 = vmatpush1.msra.mxu0 0.0
    %1666 = vmatprep.mubr.f32.mxu0 0.0
    %1667 = vmatmul.mubr.f32.gmra.mrb[0].mxu0 %v1600
    %v1668 = vpop.f32.mrb[0].mxu0
    %v1669 = vadd.f32 %v337, %v1668
    %v1670 = vpop.f32.mrb[0].mxu0
    %1671 = vdwg.mxu0
    %v1672 = vxor.u32 %v1669, 2147483648
    %v1673 = vmul.f32 %v1672, 1.442695
    %v1674 = vpow.pop %v1673
    %v1675 = vadd.f32 %v1674, 1.0
    %v1676 = vrcp.pop %v1675
    %v1677 = vmul.f32 1.0, %v1676
    %1679 = vrot.lane.b32.xlu0 %v1669, 32
    %v1680 = vpop.permute.xlu0 %1679
    %v1682 = vmul.f32 %v1677, %v1680
    %1684 = vrot.lane.b32.xlu0 %v1682, 64
    %v1685 = vpop.permute.xlu0 %1684
    %v1687 = vadd.f32 %v1669, %v1685
    %v1688 = vtanh.pop %v1687
    %v1689 = vsub.f32 1.0, %v1677
    %1691 = vrot.lane.b32.xlu0 %v1688, 96
    %v1692 = vpop.permute.xlu0 %1691
    %v1694 = vmul.f32 %v1689, %v1692
    %v1695 = vmul.f32 %v1677, %v1486
    %v1696 = vadd.f32 %v1694, %v1695
    %1698 = vrot.lane.b32.xlu0 %v1696, 96
    %v1699 = vpop.permute.xlu0 %1698
    %s1701 = scalar_lea.vmem [#allocation3], 48
    %1702 = vst.msk [vmem:[%s1701] sm:$0xff] %vm219, %v1699
    %s1703 = scalar_lea.vmem [#allocation2], 56
    %v1704 = vld [vmem:[%s1703] sm:$0xff]
    %v1705 = vsel %vm219, %v1596, 0
    %1707 = vmatprep.subr.mxu0 0.0
    %1708 = vmatpush1.msra.mxu0 %v204
    %1709 = vmatprep.subr.mxu0 0.0
    %1710 = vmatpush1.msra.mxu0 %v205
    %1711 = vmatprep.subr.mxu0 0.0
    %1712 = vmatpush1.msra.mxu0 %v206
    %1713 = vmatprep.subr.mxu0 0.0
    %1714 = vmatpush1.msra.mxu0 %v207
    %1715 = vmatprep.subr.mxu0 0.0
    %1716 = vmatpush1.msra.mxu0 0.0
    %1717 = vmatprep.subr.mxu0 0.0
    %1718 = vmatpush1.msra.mxu0 0.0
    %1719 = vmatprep.subr.mxu0 0.0
    %1720 = vmatpush1.msra.mxu0 0.0
    %1721 = vmatprep.subr.mxu0 0.0
    %1722 = vmatpush1.msra.mxu0 0.0
    %1723 = vmatprep.subr.mxu0 0.0
    %1724 = vmatpush1.msra.mxu0 0.0
    %1725 = vmatprep.subr.mxu0 0.0
    %1726 = vmatpush1.msra.mxu0 0.0
    %1727 = vmatprep.subr.mxu0 0.0
    %1728 = vmatpush1.msra.mxu0 0.0
    %1729 = vmatprep.subr.mxu0 0.0
    %1730 = vmatpush1.msra.mxu0 0.0
    %1731 = vmatprep.subr.mxu0 0.0
    %1732 = vmatpush1.msra.mxu0 0.0
    %1733 = vmatprep.subr.mxu0 0.0
    %1734 = vmatpush1.msra.mxu0 0.0
    %1735 = vmatprep.subr.mxu0 0.0
    %1736 = vmatpush1.msra.mxu0 0.0
    %1737 = vmatprep.subr.mxu0 0.0
    %1738 = vmatpush1.msra.mxu0 0.0
    %1739 = vmatprep.subr.mxu0 0.0
    %1740 = vmatpush1.msra.mxu0 0.0
    %1741 = vmatprep.subr.mxu0 0.0
    %1742 = vmatpush1.msra.mxu0 0.0
    %1743 = vmatprep.subr.mxu0 0.0
    %1744 = vmatpush1.msra.mxu0 0.0
    %1745 = vmatprep.subr.mxu0 0.0
    %1746 = vmatpush1.msra.mxu0 0.0
    %1747 = vmatprep.subr.mxu0 0.0
    %1748 = vmatpush1.msra.mxu0 0.0
    %1749 = vmatprep.subr.mxu0 0.0
    %1750 = vmatpush1.msra.mxu0 0.0
    %1751 = vmatprep.subr.mxu0 0.0
    %1752 = vmatpush1.msra.mxu0 0.0
    %1753 = vmatprep.subr.mxu0 0.0
    %1754 = vmatpush1.msra.mxu0 0.0
    %1755 = vmatprep.subr.mxu0 0.0
    %1756 = vmatpush1.msra.mxu0 0.0
    %1757 = vmatprep.subr.mxu0 0.0
    %1758 = vmatpush1.msra.mxu0 0.0
    %1759 = vmatprep.subr.mxu0 0.0
    %1760 = vmatpush1.msra.mxu0 0.0
    %1761 = vmatprep.subr.mxu0 0.0
    %1762 = vmatpush1.msra.mxu0 0.0
    %1763 = vmatprep.subr.mxu0 0.0
    %1764 = vmatpush1.msra.mxu0 0.0
    %1765 = vmatprep.subr.mxu0 0.0
    %1766 = vmatpush1.msra.mxu0 0.0
    %1767 = vmatprep.subr.mxu0 0.0
    %1768 = vmatpush1.msra.mxu0 0.0
    %1769 = vmatprep.subr.mxu0 0.0
    %1770 = vmatpush1.msra.mxu0 0.0
    %1771 = vmatprep.mubr.f32.mxu0 0.0
    %1772 = vmatmul.mubr.f32.gmra.mrb[0].mxu0 %v1705
    %v1773 = vpop.f32.mrb[0].mxu0
    %v1774 = vadd.f32 0.0, %v1773
    %v1775 = vpop.f32.mrb[0].mxu0
    %1776 = vdwg.mxu0
    %v1777 = vadd.f32 %v1704, %v1774
    %v1778 = vxor.u32 %v1777, 2147483648
    %v1779 = vmul.f32 %v1778, 1.442695
    %v1780 = vpow.pop %v1779
    %v1781 = vadd.f32 %v1780, 1.0
    %v1782 = vrcp.pop %v1781
    %v1783 = vmul.f32 1.0, %v1782
    %v1784 = vadd.f32 %v1774, %v306
    %1786 = vrot.lane.b32.xlu0 %v1784, 64
    %v1787 = vpop.permute.xlu0 %1786
    %v1789 = vmul.f32 %v1783, %v1787
    %1791 = vrot.lane.b32.xlu0 %v1789, 64
    %v1792 = vpop.permute.xlu0 %1791
    %v1794 = vadd.f32 %v1704, %v1792
    %v1795 = vtanh.pop %v1794
    %v1796 = vsub.f32 1.0, %v1783
    %1798 = vrot.lane.b32.xlu0 %v1795, 96
    %v1799 = vpop.permute.xlu0 %1798
    %v1801 = vmul.f32 %v1796, %v1799
    %v1802 = vmul.f32 %v1783, %v1593
    %v1803 = vadd.f32 %v1801, %v1802
    %1805 = vrot.lane.b32.xlu0 %v1803, 96
    %v1806 = vpop.permute.xlu0 %1805
    %v1808 = vsel %vm219, %v1806, %v1696
    %v1810 = vsel %vm339, %v1808, 0
    %1812 = vmatprep.subr.mxu0 0.0
    %1813 = vmatpush1.msra.mxu0 %v209
    %1814 = vmatprep.subr.mxu0 0.0
    %1815 = vmatpush1.msra.mxu0 %v210
    %1816 = vmatprep.subr.mxu0 0.0
    %1817 = vmatpush1.msra.mxu0 %v211
    %1818 = vmatprep.subr.mxu0 0.0
    %1819 = vmatpush1.msra.mxu0 %v212
    %1820 = vmatprep.subr.mxu0 0.0
    %1821 = vmatpush1.msra.mxu0 %v213
    %1822 = vmatprep.subr.mxu0 0.0
    %1823 = vmatpush1.msra.mxu0 %v214
    %1824 = vmatprep.subr.mxu0 0.0
    %1825 = vmatpush1.msra.mxu0 %v215
    %1826 = vmatprep.subr.mxu0 0.0
    %1827 = vmatpush1.msra.mxu0 %v216
    %1828 = vmatprep.subr.mxu0 0.0
    %1829 = vmatpush1.msra.mxu0 0.0
    %1830 = vmatprep.subr.mxu0 0.0
    %1831 = vmatpush1.msra.mxu0 0.0
    %1832 = vmatprep.subr.mxu0 0.0
    %1833 = vmatpush1.msra.mxu0 0.0
    %1834 = vmatprep.subr.mxu0 0.0
    %1835 = vmatpush1.msra.mxu0 0.0
    %1836 = vmatprep.subr.mxu0 0.0
    %1837 = vmatpush1.msra.mxu0 0.0
    %1838 = vmatprep.subr.mxu0 0.0
    %1839 = vmatpush1.msra.mxu0 0.0
    %1840 = vmatprep.subr.mxu0 0.0
    %1841 = vmatpush1.msra.mxu0 0.0
    %1842 = vmatprep.subr.mxu0 0.0
    %1843 = vmatpush1.msra.mxu0 0.0
    %1844 = vmatprep.subr.mxu0 0.0
    %1845 = vmatpush1.msra.mxu0 0.0
    %1846 = vmatprep.subr.mxu0 0.0
    %1847 = vmatpush1.msra.mxu0 0.0
    %1848 = vmatprep.subr.mxu0 0.0
    %1849 = vmatpush1.msra.mxu0 0.0
    %1850 = vmatprep.subr.mxu0 0.0
    %1851 = vmatpush1.msra.mxu0 0.0
    %1852 = vmatprep.subr.mxu0 0.0
    %1853 = vmatpush1.msra.mxu0 0.0
    %1854 = vmatprep.subr.mxu0 0.0
    %1855 = vmatpush1.msra.mxu0 0.0
    %1856 = vmatprep.subr.mxu0 0.0
    %1857 = vmatpush1.msra.mxu0 0.0
    %1858 = vmatprep.subr.mxu0 0.0
    %1859 = vmatpush1.msra.mxu0 0.0
    %1860 = vmatprep.subr.mxu0 0.0
    %1861 = vmatpush1.msra.mxu0 0.0
    %1862 = vmatprep.subr.mxu0 0.0
    %1863 = vmatpush1.msra.mxu0 0.0
    %1864 = vmatprep.subr.mxu0 0.0
    %1865 = vmatpush1.msra.mxu0 0.0
    %1866 = vmatprep.subr.mxu0 0.0
    %1867 = vmatpush1.msra.mxu0 0.0
    %1868 = vmatprep.subr.mxu0 0.0
    %1869 = vmatpush1.msra.mxu0 0.0
    %1870 = vmatprep.subr.mxu0 0.0
    %1871 = vmatpush1.msra.mxu0 0.0
    %1872 = vmatprep.subr.mxu0 0.0
    %1873 = vmatpush1.msra.mxu0 0.0
    %1874 = vmatprep.subr.mxu0 0.0
    %1875 = vmatpush1.msra.mxu0 0.0
    %1876 = vmatprep.mubr.f32.mxu0 0.0
    %1877 = vmatmul.mubr.f32.gmra.mrb[0].mxu0 %v1810
    %v1878 = vpop.f32.mrb[0].mxu0
    %v1879 = vadd.f32 %v337, %v1878
    %v1880 = vpop.f32.mrb[0].mxu0
    %1881 = vdwg.mxu0
    %v1882 = vxor.u32 %v1879, 2147483648
    %v1883 = vmul.f32 %v1882, 1.442695
    %v1884 = vpow.pop %v1883
    %v1885 = vadd.f32 %v1884, 1.0
    %v1886 = vrcp.pop %v1885
    %v1887 = vmul.f32 1.0, %v1886
    %1889 = vrot.lane.b32.xlu0 %v1879, 32
    %v1890 = vpop.permute.xlu0 %1889
    %v1892 = vmul.f32 %v1887, %v1890
    %1894 = vrot.lane.b32.xlu0 %v1892, 64
    %v1895 = vpop.permute.xlu0 %1894
    %v1897 = vadd.f32 %v1879, %v1895
    %v1898 = vtanh.pop %v1897
    %v1899 = vsub.f32 1.0, %v1887
    %1901 = vrot.lane.b32.xlu0 %v1898, 96
    %v1902 = vpop.permute.xlu0 %1901
    %v1904 = vmul.f32 %v1899, %v1902
    %v1905 = vmul.f32 %v1887, %v1696
    %v1906 = vadd.f32 %v1904, %v1905
    %1908 = vrot.lane.b32.xlu0 %v1906, 96
    %v1909 = vpop.permute.xlu0 %1908
    %s1911 = scalar_lea.vmem [#allocation3], 56
    %1912 = vst.msk [vmem:[%s1911] sm:$0xff] %vm219, %v1909
    %v1913 = vld [vmem:[#allocation3] sm:$0xff]
    %v1914 = vld [vmem:[#allocation3 + $0x8] sm:$0xff]
    %v1915 = vld [vmem:[#allocation3 + $0x10] sm:$0xff]
    %v1916 = vld [vmem:[#allocation3 + $0x18] sm:$0xff]
    %v1917 = vld [vmem:[#allocation3 + $0x20] sm:$0xff]
    %v1918 = vld [vmem:[#allocation3 + $0x28] sm:$0xff]
    %v1919 = vld [vmem:[#allocation3 + $0x30] sm:$0xff]
    %v1920 = vld [vmem:[#allocation3 + $0x38] sm:$0xff]
    %v1921 = vld [vmem:[%s7] sm:$0x1]
    %v1923 = vlaneseq
    %v1924 = vshrl.u32 %v1923, 7
    %v1925 = vsub.s32 0, %v1924
    %v1926 = vrot.slane %v1921, %v1925
    %v1928 = vmul.f32 %v1913, %v1926
    %v1929 = vmul.f32 %v1914, %v1926
    %v1930 = vmul.f32 %v1915, %v1926
    %v1931 = vmul.f32 %v1916, %v1926
    %v1932 = vmul.f32 %v1917, %v1926
    %v1933 = vmul.f32 %v1918, %v1926
    %v1934 = vmul.f32 %v1919, %v1926
    %v1935 = vmul.f32 %v1920, %v1926
    %v1936 = vsel %vm219, %v1928, 0.0
    %1937 = vadd.xlane.f32.xlu0 %v1936
    %v1938 = vpop.xlane.xlu0 %1937
    %v1939 = vsel %vm219, %v1929, 0.0
    %1940 = vadd.xlane.f32.xlu0 %v1939
    %v1941 = vpop.xlane.xlu0 %1940
    %v1942 = vsel %vm219, %v1930, 0.0
    %1943 = vadd.xlane.f32.xlu0 %v1942
    %v1944 = vpop.xlane.xlu0 %1943
    %v1945 = vsel %vm219, %v1931, 0.0
    %1946 = vadd.xlane.f32.xlu0 %v1945
    %v1947 = vpop.xlane.xlu0 %1946
    %v1948 = vsel %vm219, %v1932, 0.0
    %1949 = vadd.xlane.f32.xlu0 %v1948
    %v1950 = vpop.xlane.xlu0 %1949
    %v1951 = vsel %vm219, %v1933, 0.0
    %1952 = vadd.xlane.f32.xlu0 %v1951
    %v1953 = vpop.xlane.xlu0 %1952
    %v1954 = vsel %vm219, %v1934, 0.0
    %1955 = vadd.xlane.f32.xlu0 %v1954
    %v1956 = vpop.xlane.xlu0 %1955
    %v1957 = vsel %vm219, %v1935, 0.0
    %1958 = vadd.xlane.f32.xlu0 %v1957
    %v1959 = vpop.xlane.xlu0 %1958
    %v1960 = vld [vmem:[#allocation4] sm:$0x1]
    %v1962 = vlaneseq
    %v1963 = vshrl.u32 %v1962, 7
    %v1964 = vsub.s32 0, %v1963
    %v1965 = vrot.slane %v1960, %v1964
    %1966 = vset.pattern.permute.xlu0 0
    %1967 = vperm.xlu0 %1966, %v1965
    %v1968 = vpop.permute.xlu0 %1967
    %v1970 = vadd.f32 %v1938, %v1968
    %v1971 = vadd.f32 %v1941, %v1968
    %v1972 = vadd.f32 %v1944, %v1968
    %v1973 = vadd.f32 %v1947, %v1968
    %v1974 = vadd.f32 %v1950, %v1968
    %v1975 = vadd.f32 %v1953, %v1968
    %v1976 = vadd.f32 %v1956, %v1968
    %v1977 = vadd.f32 %v1959, %v1968
    %v1978 = vxor.u32 %v1970, 2147483648
    %v1979 = vxor.u32 %v1971, 2147483648
    %v1980 = vxor.u32 %v1972, 2147483648
    %v1981 = vxor.u32 %v1973, 2147483648
    %v1982 = vxor.u32 %v1974, 2147483648
    %v1983 = vxor.u32 %v1975, 2147483648
    %v1984 = vxor.u32 %v1976, 2147483648
    %v1985 = vxor.u32 %v1977, 2147483648
    %v1986 = vmul.f32 %v1978, 1.442695
    %v1987 = vpow.pop %v1986
    %v1988 = vmul.f32 %v1979, 1.442695
    %v1989 = vpow.pop %v1988
    %v1990 = vmul.f32 %v1980, 1.442695
    %v1991 = vpow.pop %v1990
    %v1992 = vmul.f32 %v1981, 1.442695
    %v1993 = vpow.pop %v1992
    %v1994 = vmul.f32 %v1982, 1.442695
    %v1995 = vpow.pop %v1994
    %v1996 = vmul.f32 %v1983, 1.442695
    %v1997 = vpow.pop %v1996
    %v1998 = vmul.f32 %v1984, 1.442695
    %v1999 = vpow.pop %v1998
    %v2000 = vmul.f32 %v1985, 1.442695
    %v2001 = vpow.pop %v2000
    %v2002 = vadd.f32 %v1987, 1.0
    %v2003 = vadd.f32 %v1989, 1.0
    %v2004 = vadd.f32 %v1991, 1.0
    %v2005 = vadd.f32 %v1993, 1.0
    %v2006 = vadd.f32 %v1995, 1.0
    %v2007 = vadd.f32 %v1997, 1.0
    %v2008 = vadd.f32 %v1999, 1.0
    %v2009 = vadd.f32 %v2001, 1.0
    %v2010 = vrcp.pop %v2002
    %v2011 = vmul.f32 1.0, %v2010
    %v2012 = vrcp.pop %v2003
    %v2013 = vmul.f32 1.0, %v2012
    %v2014 = vrcp.pop %v2004
    %v2015 = vmul.f32 1.0, %v2014
    %v2016 = vrcp.pop %v2005
    %v2017 = vmul.f32 1.0, %v2016
    %v2018 = vrcp.pop %v2006
    %v2019 = vmul.f32 1.0, %v2018
    %v2020 = vrcp.pop %v2007
    %v2021 = vmul.f32 1.0, %v2020
    %v2022 = vrcp.pop %v2008
    %v2023 = vmul.f32 1.0, %v2022
    %v2024 = vrcp.pop %v2009
    %v2025 = vmul.f32 1.0, %v2024
    %v2034 = vlaneseq
    %v2035 = vand.u32 %v2034, 127
    %v2036 = vlaneseq
    %v2037 = vshrl.u32 %v2036, 7
    %v2038 = vsub.s32 %v2035, %v2037
    %v2039 = vrot.slane %v2011, %v2038
    %v2040 = vlaneseq
    %v2041 = vshrl.u32 %v2040, 7
    %v2042 = vsub.s32 %v2035, %v2041
    %v2043 = vrot.slane %v2013, %v2042
    %v2044 = vlaneseq
    %v2045 = vshrl.u32 %v2044, 7
    %v2046 = vsub.s32 %v2035, %v2045
    %v2047 = vrot.slane %v2015, %v2046
    %v2048 = vlaneseq
    %v2049 = vshrl.u32 %v2048, 7
    %v2050 = vsub.s32 %v2035, %v2049
    %v2051 = vrot.slane %v2017, %v2050
    %v2052 = vlaneseq
    %v2053 = vshrl.u32 %v2052, 7
    %v2054 = vsub.s32 %v2035, %v2053
    %v2055 = vrot.slane %v2019, %v2054
    %v2056 = vlaneseq
    %v2057 = vshrl.u32 %v2056, 7
    %v2058 = vsub.s32 %v2035, %v2057
    %v2059 = vrot.slane %v2021, %v2058
    %v2060 = vlaneseq
    %v2061 = vshrl.u32 %v2060, 7
    %v2062 = vsub.s32 %v2035, %v2061
    %v2063 = vrot.slane %v2023, %v2062
    %v2064 = vlaneseq
    %v2065 = vshrl.u32 %v2064, 7
    %v2066 = vsub.s32 %v2035, %v2065
    %v2067 = vrot.slane %v2025, %v2066
    %vm2068 = vcmask 1041409
    %v2069 = vsel %vm2068, %v2043, %v2039
    %vm2070 = vcmask 1042434
    %v2071 = vsel %vm2070, %v2047, %v2069
    %vm2072 = vcmask 1043459
    %v2073 = vsel %vm2072, %v2051, %v2071
    %vm2074 = vcmask 1044484
    %v2075 = vsel %vm2074, %v2055, %v2073
    %vm2076 = vcmask 1045509
    %v2077 = vsel %vm2076, %v2059, %v2075
    %vm2078 = vcmask 1046534
    %v2079 = vsel %vm2078, %v2063, %v2077
    %vm2080 = vcmask 1047559
    %v2081 = vsel %vm2080, %v2067, %v2079
    %2083 = vst.msk [vmem:[#allocation8] sm:$0xff] %vm65, %v2081
    // Predicated region
    $region42: #{tpu_custom_call.1} parent=1 // pred_check
      _
    $region43: #{tpu_custom_call.1} parent=1 // pred_check_branch
      %2085 = sbr.rel (0) target = $region45
    $region44: #{tpu_custom_call.1} parent=1 // pred_region
      %s2087 = ssub.s32 128, 128
      %2088 = vsyncadd [#allocation7], %s2087
      %s2090 = sshll.u32 [#allocation8], 4
      %s2091 = int_to_ptr.vmem [resolvable:$true] %s2090
      %2093 = dma.vmem_to_hbm [thread:$0]  %s2091, 128, %s9, [#allocation7]
    $region45: #{tpu_custom_call.1} parent=1 // pred_fallthru
      _
    // Predicated region
    $region46: #{tpu_custom_call.1} parent=1 // pred_check
      _
    $region47: #{tpu_custom_call.1} parent=1 // pred_check_branch
      %2095 = sbr.rel (0) target = $region49
    $region48: #{tpu_custom_call.1} parent=1 // pred_region
      %2096 = dma.done [#allocation7], 128
    $region49: #{tpu_custom_call.1} parent=1 // pred_fallthru
      _
    %2097 = vsyncpa [#allocation6], 1
    %2098 = vsyncpa [#allocation7], 1

</llo_original>
